<compile_context>
chip_gen: v5e
topology: v5e:2x2
jax: 0.10.0
libtpu: 0.0.40
codegen_flags: <defaults>
</compile_context>

<pallas_src>
import functools

import jax
import jax.numpy as jnp
from jax.experimental import pallas as pl


# ------------------------------ fused SingleModel kernel ------------------------------
def single_model_kernel(x_ref, wih_ref, whh_ref, bih_ref, bhh_ref,
                        whead_ref, bhead_ref, logit_ref, pred_ref):
    # x_ref:     (B, T, I)       batch-first input
    # wih_ref:   (3, I, H)       gate-major input->hidden weights (gate order r|z|n)
    # whh_ref:   (3, H, H)       gate-major hidden->hidden weights
    # bih_ref:   (3, 1, H), bhh_ref: (3, 1, H)
    # whead_ref: (H, NO*C)       all head weights packed lane-dense
    # bhead_ref: (1, NO*C)
    # logit_ref: (NO, B, C)      per-head logits
    # pred_ref:  (NO, B, C)      per-head softmax
    B, T, I = x_ref.shape
    H = whh_ref.shape[1]
    NO, _, C = logit_ref.shape

    # ---- hoisted input projection: one (B*T, I) @ (I, H) matmul per gate, outside the loop.
    x2d = x_ref[...].reshape(B * T, I)
    gi_r = (jnp.dot(x2d, wih_ref[0], preferred_element_type=jnp.float32)
            + bih_ref[0]).reshape(B, T, H)
    gi_z = (jnp.dot(x2d, wih_ref[1], preferred_element_type=jnp.float32)
            + bih_ref[1]).reshape(B, T, H)
    gi_n = (jnp.dot(x2d, wih_ref[2], preferred_element_type=jnp.float32)
            + bih_ref[2]).reshape(B, T, H)

    # Gate-major hidden weights: small at H=32, fine to hold in vregs.
    # (At H >= 128, index whh_ref[g] inside the step instead to avoid vreg spills.)
    w_hh_r = whh_ref[0]
    w_hh_z = whh_ref[1]
    w_hh_n = whh_ref[2]
    b_hh_r = bhh_ref[0]
    b_hh_z = bhh_ref[1]
    b_hh_n = bhh_ref[2]

    # ---- fully unrolled recurrence (T small & static); PyTorch GRU gate equations.
    h = jnp.zeros((B, H), jnp.float32)
    for t in range(T):
        gh_r = jnp.dot(h, w_hh_r, preferred_element_type=jnp.float32) + b_hh_r
        gh_z = jnp.dot(h, w_hh_z, preferred_element_type=jnp.float32) + b_hh_z
        gh_n = jnp.dot(h, w_hh_n, preferred_element_type=jnp.float32) + b_hh_n
        r = jax.nn.sigmoid(gi_r[:, t, :] + gh_r)
        z = jax.nn.sigmoid(gi_z[:, t, :] + gh_z)
        n = jnp.tanh(gi_n[:, t, :] + r * gh_n)
        h = (1.0 - z) * n + z * h

    # ---- fused heads: one lane-dense matmul for all heads, then per-head softmax.
    logits_all = (jnp.dot(h, whead_ref[...], preferred_element_type=jnp.float32)
                  + bhead_ref[...])                               # (B, NO*C)
    for o in range(NO):                                           # NO is small & static
        lg = logits_all[:, o * C:(o + 1) * C]                     # static slice, done once
        logit_ref[o] = lg
        m = jnp.max(lg, axis=-1, keepdims=True)
        e = jnp.exp(lg - m)
        pred_ref[o] = e * pl.reciprocal(jnp.sum(e, axis=-1, keepdims=True), approx=True)


# ------------------------------------- wrapper -------------------------------------
@functools.partial(jax.jit, static_argnames=("num_outputs", "num_classes"))
def single_model_forward(x_bti, kparams, *, num_outputs, num_classes):
    # x_bti: (B, T, I) batch-first input (like torch GRU(batch_first=True)).
    B = x_bti.shape[0]
    logit_obc, pred_obc = pl.pallas_call(
        single_model_kernel,
        out_shape=(
            jax.ShapeDtypeStruct((num_outputs, B, num_classes), jnp.float32),
            jax.ShapeDtypeStruct((num_outputs, B, num_classes), jnp.float32),
        ),
    )(x_bti, kparams["wih_g"], kparams["whh_g"], kparams["bih_g"], kparams["bhh_g"],
      kparams["whead"], kparams["bhead"])
    # torch.cat(logit_list, dim=0) == merge the (num_outputs, B) leading axes.
    logit = logit_obc.reshape(num_outputs * B, num_classes)
    # F.softmax(torch.stack(logit_list), dim=-1) == pred_obc, shape (num_outputs, B, C).
    return logit, pred_obc


def pack_params(tp):
    """Convert torch-layout GRU + head params to the kernel's gate-major / transposed layout."""
    w_ih, w_hh = tp["weight_ih"], tp["weight_hh"]            # (3H, I), (3H, H), rows [r|z|n]
    b_ih, b_hh = tp["bias_ih"], tp["bias_hh"]                # (3H,)
    w_heads, b_heads = tp["head_weight"], tp["head_bias"]    # (NO, C, H), (NO, C)
    H = w_hh.shape[1]
    NO, C, _ = w_heads.shape
    return {
        "wih_g": jnp.transpose(w_ih.reshape(3, H, -1), (0, 2, 1)),      # (3, I, H)
        "whh_g": jnp.transpose(w_hh.reshape(3, H, H), (0, 2, 1)),       # (3, H, H)
        "bih_g": b_ih.reshape(3, 1, H),
        "bhh_g": b_hh.reshape(3, 1, H),
        "whead": jnp.transpose(w_heads, (2, 0, 1)).reshape(H, NO * C),  # (H, NO*C)
        "bhead": b_heads.reshape(1, NO * C),
    }


# -------------------------------- pure-JAX reference --------------------------------
def reference_forward(x_bti, tp):
    w_ih, w_hh = tp["weight_ih"], tp["weight_hh"]
    b_ih, b_hh = tp["bias_ih"], tp["bias_hh"]
    w_heads, b_heads = tp["head_weight"], tp["head_bias"]
    B, T, _ = x_bti.shape
    H = w_hh.shape[1]
    h = jnp.zeros((B, H), jnp.float32)
    for t in range(T):
        gi = x_bti[:, t, :] @ w_ih.T + b_ih
        gh = h @ w_hh.T + b_hh
        r = jax.nn.sigmoid(gi[:, 0:H] + gh[:, 0:H])
        z = jax.nn.sigmoid(gi[:, H:2 * H] + gh[:, H:2 * H])
        n = jnp.tanh(gi[:, 2 * H:3 * H] + r * gh[:, 2 * H:3 * H])
        h = (1.0 - z) * n + z * h
    logit_list = [h @ w_heads[o].T + b_heads[o] for o in range(w_heads.shape[0])]
    logit = jnp.concatenate(logit_list, axis=0)
    prediction = jax.nn.softmax(jnp.stack(logit_list), axis=-1)
    return logit, prediction


if __name__ == "__main__":
    # small shapes consistent with the module
    B, T, I = 4, 8, 16          # batch, seq len, input size
    H = 32                      # GRU hidden size
    C = 8                       # num_classes
    NUM_OUTPUTS = 3             # num_outputs

    key = jax.random.PRNGKey(0)
    ks = jax.random.split(key, 7)
    scale = 0.1
    torch_params = {
        "weight_ih": scale * jax.random.normal(ks[1], (3 * H, I), jnp.float32),
        "weight_hh": scale * jax.random.normal(ks[2], (3 * H, H), jnp.float32),
        "bias_ih": scale * jax.random.normal(ks[3], (3 * H,), jnp.float32),
        "bias_hh": scale * jax.random.normal(ks[4], (3 * H,), jnp.float32),
        "head_weight": scale * jax.random.normal(ks[5], (NUM_OUTPUTS, C, H), jnp.float32),
        "head_bias": scale * jax.random.normal(ks[6], (NUM_OUTPUTS, C), jnp.float32),
    }
    x = jax.random.normal(ks[0], (B, T, I), jnp.float32)

    kparams = pack_params(torch_params)
    logit, prediction = single_model_forward(
        x, kparams, num_outputs=NUM_OUTPUTS, num_classes=C)
    jax.block_until_ready((logit, prediction))

    ref_logit, ref_pred = reference_forward(x, torch_params)
    assert logit.shape == (NUM_OUTPUTS * B, C)
    assert prediction.shape == (NUM_OUTPUTS, B, C)
    assert jnp.allclose(logit, ref_logit, atol=1e-5, rtol=1e-5), \
        float(jnp.max(jnp.abs(logit - ref_logit)))
    # prediction uses approx reciprocal (EUP vrcp) -> slightly looser tolerance
    assert jnp.allclose(prediction, ref_pred, atol=2e-3, rtol=2e-3), \
        float(jnp.max(jnp.abs(prediction - ref_pred)))

    print("KERNEL_OK")
</pallas_src>

<mosaic_0001>
module attributes {stable_mosaic.version = 11 : i64} {
  func.func @single_model_kernel(%arg0: memref<4x8x16xf32, #tpu.memory_space<vmem>>, %arg1: memref<3x16x32xf32, #tpu.memory_space<vmem>>, %arg2: memref<3x32x32xf32, #tpu.memory_space<vmem>>, %arg3: memref<3x1x32xf32, #tpu.memory_space<vmem>>, %arg4: memref<3x1x32xf32, #tpu.memory_space<vmem>>, %arg5: memref<32x24xf32, #tpu.memory_space<vmem>>, %arg6: memref<1x24xf32, #tpu.memory_space<vmem>>, %arg7: memref<3x4x8xf32, #tpu.memory_space<vmem>>, %arg8: memref<3x4x8xf32, #tpu.memory_space<vmem>>) attributes {dimension_semantics = [], scalar_prefetch = 0 : i64, scratch_operands = 0 : i64, tpu.core_type = #tpu.core_type<tc>} {
    %c0 = arith.constant 0 : index
    %c0_0 = arith.constant 0 : index
    %c0_1 = arith.constant 0 : index
    %0 = vector.load %arg0[%c0, %c0_0, %c0_1] : memref<4x8x16xf32, #tpu.memory_space<vmem>>, vector<4x8x16xf32>
    %1 = vector.shape_cast %0 : vector<4x8x16xf32> to vector<32x16xf32>
    %c0_2 = arith.constant 0 : index
    %c0_3 = arith.constant 0 : index
    %c0_4 = arith.constant 0 : index
    %2 = vector.load %arg1[%c0_2, %c0_3, %c0_4] : memref<3x16x32xf32, #tpu.memory_space<vmem>>, vector<1x16x32xf32>
    %3 = vector.shape_cast %2 : vector<1x16x32xf32> to vector<16x32xf32>
    %cst = arith.constant dense<0.000000e+00> : vector<32x32xf32>
    %4 = tpu.matmul %1, %3, %cst {dimension_numbers = #tpu.dot_dimension_numbers<[1], [0], [0], [1], [0, 0, 1, 1], [], []>} : vector<32x16xf32>, vector<16x32xf32>, vector<32x32xf32> -> vector<32x32xf32>
    %c0_5 = arith.constant 0 : index
    %c0_6 = arith.constant 0 : index
    %c0_7 = arith.constant 0 : index
    %5 = vector.load %arg3[%c0_5, %c0_6, %c0_7] : memref<3x1x32xf32, #tpu.memory_space<vmem>>, vector<1x1x32xf32>
    %6 = vector.shape_cast %5 : vector<1x1x32xf32> to vector<1x32xf32>
    %7 = vector.broadcast %6 : vector<1x32xf32> to vector<32x32xf32>
    %8 = arith.addf %4, %7 : vector<32x32xf32>
    %9 = vector.shape_cast %8 : vector<32x32xf32> to vector<4x8x32xf32>
    %c1 = arith.constant 1 : index
    %c0_8 = arith.constant 0 : index
    %c0_9 = arith.constant 0 : index
    %10 = vector.load %arg1[%c1, %c0_8, %c0_9] : memref<3x16x32xf32, #tpu.memory_space<vmem>>, vector<1x16x32xf32>
    %11 = vector.shape_cast %10 : vector<1x16x32xf32> to vector<16x32xf32>
    %cst_10 = arith.constant dense<0.000000e+00> : vector<32x32xf32>
    %12 = tpu.matmul %1, %11, %cst_10 {dimension_numbers = #tpu.dot_dimension_numbers<[1], [0], [0], [1], [0, 0, 1, 1], [], []>} : vector<32x16xf32>, vector<16x32xf32>, vector<32x32xf32> -> vector<32x32xf32>
    %c1_11 = arith.constant 1 : index
    %c0_12 = arith.constant 0 : index
    %c0_13 = arith.constant 0 : index
    %13 = vector.load %arg3[%c1_11, %c0_12, %c0_13] : memref<3x1x32xf32, #tpu.memory_space<vmem>>, vector<1x1x32xf32>
    %14 = vector.shape_cast %13 : vector<1x1x32xf32> to vector<1x32xf32>
    %15 = vector.broadcast %14 : vector<1x32xf32> to vector<32x32xf32>
    %16 = arith.addf %12, %15 : vector<32x32xf32>
    %17 = vector.shape_cast %16 : vector<32x32xf32> to vector<4x8x32xf32>
    %c2 = arith.constant 2 : index
    %c0_14 = arith.constant 0 : index
    %c0_15 = arith.constant 0 : index
    %18 = vector.load %arg1[%c2, %c0_14, %c0_15] : memref<3x16x32xf32, #tpu.memory_space<vmem>>, vector<1x16x32xf32>
    %19 = vector.shape_cast %18 : vector<1x16x32xf32> to vector<16x32xf32>
    %cst_16 = arith.constant dense<0.000000e+00> : vector<32x32xf32>
    %20 = tpu.matmul %1, %19, %cst_16 {dimension_numbers = #tpu.dot_dimension_numbers<[1], [0], [0], [1], [0, 0, 1, 1], [], []>} : vector<32x16xf32>, vector<16x32xf32>, vector<32x32xf32> -> vector<32x32xf32>
    %c2_17 = arith.constant 2 : index
    %c0_18 = arith.constant 0 : index
    %c0_19 = arith.constant 0 : index
    %21 = vector.load %arg3[%c2_17, %c0_18, %c0_19] : memref<3x1x32xf32, #tpu.memory_space<vmem>>, vector<1x1x32xf32>
    %22 = vector.shape_cast %21 : vector<1x1x32xf32> to vector<1x32xf32>
    %23 = vector.broadcast %22 : vector<1x32xf32> to vector<32x32xf32>
    %24 = arith.addf %20, %23 : vector<32x32xf32>
    %25 = vector.shape_cast %24 : vector<32x32xf32> to vector<4x8x32xf32>
    %c0_20 = arith.constant 0 : index
    %c0_21 = arith.constant 0 : index
    %c0_22 = arith.constant 0 : index
    %26 = vector.load %arg2[%c0_20, %c0_21, %c0_22] : memref<3x32x32xf32, #tpu.memory_space<vmem>>, vector<1x32x32xf32>
    %27 = vector.shape_cast %26 : vector<1x32x32xf32> to vector<32x32xf32>
    %c1_23 = arith.constant 1 : index
    %c0_24 = arith.constant 0 : index
    %c0_25 = arith.constant 0 : index
    %28 = vector.load %arg2[%c1_23, %c0_24, %c0_25] : memref<3x32x32xf32, #tpu.memory_space<vmem>>, vector<1x32x32xf32>
    %29 = vector.shape_cast %28 : vector<1x32x32xf32> to vector<32x32xf32>
    %c2_26 = arith.constant 2 : index
    %c0_27 = arith.constant 0 : index
    %c0_28 = arith.constant 0 : index
    %30 = vector.load %arg2[%c2_26, %c0_27, %c0_28] : memref<3x32x32xf32, #tpu.memory_space<vmem>>, vector<1x32x32xf32>
    %31 = vector.shape_cast %30 : vector<1x32x32xf32> to vector<32x32xf32>
    %c0_29 = arith.constant 0 : index
    %c0_30 = arith.constant 0 : index
    %c0_31 = arith.constant 0 : index
    %32 = vector.load %arg4[%c0_29, %c0_30, %c0_31] : memref<3x1x32xf32, #tpu.memory_space<vmem>>, vector<1x1x32xf32>
    %33 = vector.shape_cast %32 : vector<1x1x32xf32> to vector<1x32xf32>
    %c1_32 = arith.constant 1 : index
    %c0_33 = arith.constant 0 : index
    %c0_34 = arith.constant 0 : index
    %34 = vector.load %arg4[%c1_32, %c0_33, %c0_34] : memref<3x1x32xf32, #tpu.memory_space<vmem>>, vector<1x1x32xf32>
    %35 = vector.shape_cast %34 : vector<1x1x32xf32> to vector<1x32xf32>
    %c2_35 = arith.constant 2 : index
    %c0_36 = arith.constant 0 : index
    %c0_37 = arith.constant 0 : index
    %36 = vector.load %arg4[%c2_35, %c0_36, %c0_37] : memref<3x1x32xf32, #tpu.memory_space<vmem>>, vector<1x1x32xf32>
    %37 = vector.shape_cast %36 : vector<1x1x32xf32> to vector<1x32xf32>
    %cst_38 = arith.constant 0.000000e+00 : f32
    %38 = vector.broadcast %cst_38 : f32 to vector<4x32xf32>
    %cst_39 = arith.constant dense<0.000000e+00> : vector<4x32xf32>
    %39 = tpu.matmul %38, %27, %cst_39 {dimension_numbers = #tpu.dot_dimension_numbers<[1], [0], [0], [1], [0, 0, 1, 1], [], []>} : vector<4x32xf32>, vector<32x32xf32>, vector<4x32xf32> -> vector<4x32xf32>
    %40 = vector.broadcast %33 : vector<1x32xf32> to vector<4x32xf32>
    %41 = arith.addf %39, %40 : vector<4x32xf32>
    %cst_40 = arith.constant dense<0.000000e+00> : vector<4x32xf32>
    %42 = tpu.matmul %38, %29, %cst_40 {dimension_numbers = #tpu.dot_dimension_numbers<[1], [0], [0], [1], [0, 0, 1, 1], [], []>} : vector<4x32xf32>, vector<32x32xf32>, vector<4x32xf32> -> vector<4x32xf32>
    %43 = vector.broadcast %35 : vector<1x32xf32> to vector<4x32xf32>
    %44 = arith.addf %42, %43 : vector<4x32xf32>
    %cst_41 = arith.constant dense<0.000000e+00> : vector<4x32xf32>
    %45 = tpu.matmul %38, %31, %cst_41 {dimension_numbers = #tpu.dot_dimension_numbers<[1], [0], [0], [1], [0, 0, 1, 1], [], []>} : vector<4x32xf32>, vector<32x32xf32>, vector<4x32xf32> -> vector<4x32xf32>
    %46 = vector.broadcast %37 : vector<1x32xf32> to vector<4x32xf32>
    %47 = arith.addf %45, %46 : vector<4x32xf32>
    %48 = vector.extract_strided_slice %9 {offsets = [0, 0, 0], sizes = [4, 1, 32], strides = [1, 1, 1]} : vector<4x8x32xf32> to vector<4x1x32xf32>
    %49 = vector.shape_cast %48 : vector<4x1x32xf32> to vector<4x32xf32>
    %50 = arith.addf %49, %41 : vector<4x32xf32>
    %51 = arith.negf %50 : vector<4x32xf32>
    %52 = math.exp %51 : vector<4x32xf32>
    %cst_42 = arith.constant 1.000000e+00 : f32
    %53 = vector.broadcast %cst_42 : f32 to vector<4x32xf32>
    %54 = arith.addf %53, %52 : vector<4x32xf32>
    %55 = arith.divf %53, %54 : vector<4x32xf32>
    %56 = vector.extract_strided_slice %17 {offsets = [0, 0, 0], sizes = [4, 1, 32], strides = [1, 1, 1]} : vector<4x8x32xf32> to vector<4x1x32xf32>
    %57 = vector.shape_cast %56 : vector<4x1x32xf32> to vector<4x32xf32>
    %58 = arith.addf %57, %44 : vector<4x32xf32>
    %59 = arith.negf %58 : vector<4x32xf32>
    %60 = math.exp %59 : vector<4x32xf32>
    %cst_43 = arith.constant 1.000000e+00 : f32
    %61 = vector.broadcast %cst_43 : f32 to vector<4x32xf32>
    %62 = arith.addf %61, %60 : vector<4x32xf32>
    %63 = arith.divf %61, %62 : vector<4x32xf32>
    %64 = vector.extract_strided_slice %25 {offsets = [0, 0, 0], sizes = [4, 1, 32], strides = [1, 1, 1]} : vector<4x8x32xf32> to vector<4x1x32xf32>
    %65 = vector.shape_cast %64 : vector<4x1x32xf32> to vector<4x32xf32>
    %66 = arith.mulf %55, %47 : vector<4x32xf32>
    %67 = arith.addf %65, %66 : vector<4x32xf32>
    %68 = math.tanh %67 : vector<4x32xf32>
    %cst_44 = arith.constant 1.000000e+00 : f32
    %69 = vector.broadcast %cst_44 : f32 to vector<4x32xf32>
    %70 = arith.subf %69, %63 : vector<4x32xf32>
    %71 = arith.mulf %70, %68 : vector<4x32xf32>
    %72 = arith.mulf %63, %38 : vector<4x32xf32>
    %73 = arith.addf %71, %72 : vector<4x32xf32>
    %cst_45 = arith.constant dense<0.000000e+00> : vector<4x32xf32>
    %74 = tpu.matmul %73, %27, %cst_45 {dimension_numbers = #tpu.dot_dimension_numbers<[1], [0], [0], [1], [0, 0, 1, 1], [], []>} : vector<4x32xf32>, vector<32x32xf32>, vector<4x32xf32> -> vector<4x32xf32>
    %75 = vector.broadcast %33 : vector<1x32xf32> to vector<4x32xf32>
    %76 = arith.addf %74, %75 : vector<4x32xf32>
    %cst_46 = arith.constant dense<0.000000e+00> : vector<4x32xf32>
    %77 = tpu.matmul %73, %29, %cst_46 {dimension_numbers = #tpu.dot_dimension_numbers<[1], [0], [0], [1], [0, 0, 1, 1], [], []>} : vector<4x32xf32>, vector<32x32xf32>, vector<4x32xf32> -> vector<4x32xf32>
    %78 = vector.broadcast %35 : vector<1x32xf32> to vector<4x32xf32>
    %79 = arith.addf %77, %78 : vector<4x32xf32>
    %cst_47 = arith.constant dense<0.000000e+00> : vector<4x32xf32>
    %80 = tpu.matmul %73, %31, %cst_47 {dimension_numbers = #tpu.dot_dimension_numbers<[1], [0], [0], [1], [0, 0, 1, 1], [], []>} : vector<4x32xf32>, vector<32x32xf32>, vector<4x32xf32> -> vector<4x32xf32>
    %81 = vector.broadcast %37 : vector<1x32xf32> to vector<4x32xf32>
    %82 = arith.addf %80, %81 : vector<4x32xf32>
    %83 = vector.extract_strided_slice %9 {offsets = [0, 1, 0], sizes = [4, 1, 32], strides = [1, 1, 1]} : vector<4x8x32xf32> to vector<4x1x32xf32>
    %84 = vector.shape_cast %83 : vector<4x1x32xf32> to vector<4x32xf32>
    %85 = arith.addf %84, %76 : vector<4x32xf32>
    %86 = arith.negf %85 : vector<4x32xf32>
    %87 = math.exp %86 : vector<4x32xf32>
    %cst_48 = arith.constant 1.000000e+00 : f32
    %88 = vector.broadcast %cst_48 : f32 to vector<4x32xf32>
    %89 = arith.addf %88, %87 : vector<4x32xf32>
    %90 = arith.divf %88, %89 : vector<4x32xf32>
    %91 = vector.extract_strided_slice %17 {offsets = [0, 1, 0], sizes = [4, 1, 32], strides = [1, 1, 1]} : vector<4x8x32xf32> to vector<4x1x32xf32>
    %92 = vector.shape_cast %91 : vector<4x1x32xf32> to vector<4x32xf32>
    %93 = arith.addf %92, %79 : vector<4x32xf32>
    %94 = arith.negf %93 : vector<4x32xf32>
    %95 = math.exp %94 : vector<4x32xf32>
    %cst_49 = arith.constant 1.000000e+00 : f32
    %96 = vector.broadcast %cst_49 : f32 to vector<4x32xf32>
    %97 = arith.addf %96, %95 : vector<4x32xf32>
    %98 = arith.divf %96, %97 : vector<4x32xf32>
    %99 = vector.extract_strided_slice %25 {offsets = [0, 1, 0], sizes = [4, 1, 32], strides = [1, 1, 1]} : vector<4x8x32xf32> to vector<4x1x32xf32>
    %100 = vector.shape_cast %99 : vector<4x1x32xf32> to vector<4x32xf32>
    %101 = arith.mulf %90, %82 : vector<4x32xf32>
    %102 = arith.addf %100, %101 : vector<4x32xf32>
    %103 = math.tanh %102 : vector<4x32xf32>
    %cst_50 = arith.constant 1.000000e+00 : f32
    %104 = vector.broadcast %cst_50 : f32 to vector<4x32xf32>
    %105 = arith.subf %104, %98 : vector<4x32xf32>
    %106 = arith.mulf %105, %103 : vector<4x32xf32>
    %107 = arith.mulf %98, %73 : vector<4x32xf32>
    %108 = arith.addf %106, %107 : vector<4x32xf32>
    %cst_51 = arith.constant dense<0.000000e+00> : vector<4x32xf32>
    %109 = tpu.matmul %108, %27, %cst_51 {dimension_numbers = #tpu.dot_dimension_numbers<[1], [0], [0], [1], [0, 0, 1, 1], [], []>} : vector<4x32xf32>, vector<32x32xf32>, vector<4x32xf32> -> vector<4x32xf32>
    %110 = vector.broadcast %33 : vector<1x32xf32> to vector<4x32xf32>
    %111 = arith.addf %109, %110 : vector<4x32xf32>
    %cst_52 = arith.constant dense<0.000000e+00> : vector<4x32xf32>
    %112 = tpu.matmul %108, %29, %cst_52 {dimension_numbers = #tpu.dot_dimension_numbers<[1], [0], [0], [1], [0, 0, 1, 1], [], []>} : vector<4x32xf32>, vector<32x32xf32>, vector<4x32xf32> -> vector<4x32xf32>
    %113 = vector.broadcast %35 : vector<1x32xf32> to vector<4x32xf32>
    %114 = arith.addf %112, %113 : vector<4x32xf32>
    %cst_53 = arith.constant dense<0.000000e+00> : vector<4x32xf32>
    %115 = tpu.matmul %108, %31, %cst_53 {dimension_numbers = #tpu.dot_dimension_numbers<[1], [0], [0], [1], [0, 0, 1, 1], [], []>} : vector<4x32xf32>, vector<32x32xf32>, vector<4x32xf32> -> vector<4x32xf32>
    %116 = vector.broadcast %37 : vector<1x32xf32> to vector<4x32xf32>
    %117 = arith.addf %115, %116 : vector<4x32xf32>
    %118 = vector.extract_strided_slice %9 {offsets = [0, 2, 0], sizes = [4, 1, 32], strides = [1, 1, 1]} : vector<4x8x32xf32> to vector<4x1x32xf32>
    %119 = vector.shape_cast %118 : vector<4x1x32xf32> to vector<4x32xf32>
    %120 = arith.addf %119, %111 : vector<4x32xf32>
    %121 = arith.negf %120 : vector<4x32xf32>
    %122 = math.exp %121 : vector<4x32xf32>
    %cst_54 = arith.constant 1.000000e+00 : f32
    %123 = vector.broadcast %cst_54 : f32 to vector<4x32xf32>
    %124 = arith.addf %123, %122 : vector<4x32xf32>
    %125 = arith.divf %123, %124 : vector<4x32xf32>
    %126 = vector.extract_strided_slice %17 {offsets = [0, 2, 0], sizes = [4, 1, 32], strides = [1, 1, 1]} : vector<4x8x32xf32> to vector<4x1x32xf32>
    %127 = vector.shape_cast %126 : vector<4x1x32xf32> to vector<4x32xf32>
    %128 = arith.addf %127, %114 : vector<4x32xf32>
    %129 = arith.negf %128 : vector<4x32xf32>
    %130 = math.exp %129 : vector<4x32xf32>
    %cst_55 = arith.constant 1.000000e+00 : f32
    %131 = vector.broadcast %cst_55 : f32 to vector<4x32xf32>
    %132 = arith.addf %131, %130 : vector<4x32xf32>
    %133 = arith.divf %131, %132 : vector<4x32xf32>
    %134 = vector.extract_strided_slice %25 {offsets = [0, 2, 0], sizes = [4, 1, 32], strides = [1, 1, 1]} : vector<4x8x32xf32> to vector<4x1x32xf32>
    %135 = vector.shape_cast %134 : vector<4x1x32xf32> to vector<4x32xf32>
    %136 = arith.mulf %125, %117 : vector<4x32xf32>
    %137 = arith.addf %135, %136 : vector<4x32xf32>
    %138 = math.tanh %137 : vector<4x32xf32>
    %cst_56 = arith.constant 1.000000e+00 : f32
    %139 = vector.broadcast %cst_56 : f32 to vector<4x32xf32>
    %140 = arith.subf %139, %133 : vector<4x32xf32>
    %141 = arith.mulf %140, %138 : vector<4x32xf32>
    %142 = arith.mulf %133, %108 : vector<4x32xf32>
    %143 = arith.addf %141, %142 : vector<4x32xf32>
    %cst_57 = arith.constant dense<0.000000e+00> : vector<4x32xf32>
    %144 = tpu.matmul %143, %27, %cst_57 {dimension_numbers = #tpu.dot_dimension_numbers<[1], [0], [0], [1], [0, 0, 1, 1], [], []>} : vector<4x32xf32>, vector<32x32xf32>, vector<4x32xf32> -> vector<4x32xf32>
    %145 = vector.broadcast %33 : vector<1x32xf32> to vector<4x32xf32>
    %146 = arith.addf %144, %145 : vector<4x32xf32>
    %cst_58 = arith.constant dense<0.000000e+00> : vector<4x32xf32>
    %147 = tpu.matmul %143, %29, %cst_58 {dimension_numbers = #tpu.dot_dimension_numbers<[1], [0], [0], [1], [0, 0, 1, 1], [], []>} : vector<4x32xf32>, vector<32x32xf32>, vector<4x32xf32> -> vector<4x32xf32>
    %148 = vector.broadcast %35 : vector<1x32xf32> to vector<4x32xf32>
    %149 = arith.addf %147, %148 : vector<4x32xf32>
    %cst_59 = arith.constant dense<0.000000e+00> : vector<4x32xf32>
    %150 = tpu.matmul %143, %31, %cst_59 {dimension_numbers = #tpu.dot_dimension_numbers<[1], [0], [0], [1], [0, 0, 1, 1], [], []>} : vector<4x32xf32>, vector<32x32xf32>, vector<4x32xf32> -> vector<4x32xf32>
    %151 = vector.broadcast %37 : vector<1x32xf32> to vector<4x32xf32>
    %152 = arith.addf %150, %151 : vector<4x32xf32>
    %153 = vector.extract_strided_slice %9 {offsets = [0, 3, 0], sizes = [4, 1, 32], strides = [1, 1, 1]} : vector<4x8x32xf32> to vector<4x1x32xf32>
    %154 = vector.shape_cast %153 : vector<4x1x32xf32> to vector<4x32xf32>
    %155 = arith.addf %154, %146 : vector<4x32xf32>
    %156 = arith.negf %155 : vector<4x32xf32>
    %157 = math.exp %156 : vector<4x32xf32>
    %cst_60 = arith.constant 1.000000e+00 : f32
    %158 = vector.broadcast %cst_60 : f32 to vector<4x32xf32>
    %159 = arith.addf %158, %157 : vector<4x32xf32>
    %160 = arith.divf %158, %159 : vector<4x32xf32>
    %161 = vector.extract_strided_slice %17 {offsets = [0, 3, 0], sizes = [4, 1, 32], strides = [1, 1, 1]} : vector<4x8x32xf32> to vector<4x1x32xf32>
    %162 = vector.shape_cast %161 : vector<4x1x32xf32> to vector<4x32xf32>
    %163 = arith.addf %162, %149 : vector<4x32xf32>
    %164 = arith.negf %163 : vector<4x32xf32>
    %165 = math.exp %164 : vector<4x32xf32>
    %cst_61 = arith.constant 1.000000e+00 : f32
    %166 = vector.broadcast %cst_61 : f32 to vector<4x32xf32>
    %167 = arith.addf %166, %165 : vector<4x32xf32>
    %168 = arith.divf %166, %167 : vector<4x32xf32>
    %169 = vector.extract_strided_slice %25 {offsets = [0, 3, 0], sizes = [4, 1, 32], strides = [1, 1, 1]} : vector<4x8x32xf32> to vector<4x1x32xf32>
    %170 = vector.shape_cast %169 : vector<4x1x32xf32> to vector<4x32xf32>
    %171 = arith.mulf %160, %152 : vector<4x32xf32>
    %172 = arith.addf %170, %171 : vector<4x32xf32>
    %173 = math.tanh %172 : vector<4x32xf32>
    %cst_62 = arith.constant 1.000000e+00 : f32
    %174 = vector.broadcast %cst_62 : f32 to vector<4x32xf32>
    %175 = arith.subf %174, %168 : vector<4x32xf32>
    %176 = arith.mulf %175, %173 : vector<4x32xf32>
    %177 = arith.mulf %168, %143 : vector<4x32xf32>
    %178 = arith.addf %176, %177 : vector<4x32xf32>
    %cst_63 = arith.constant dense<0.000000e+00> : vector<4x32xf32>
    %179 = tpu.matmul %178, %27, %cst_63 {dimension_numbers = #tpu.dot_dimension_numbers<[1], [0], [0], [1], [0, 0, 1, 1], [], []>} : vector<4x32xf32>, vector<32x32xf32>, vector<4x32xf32> -> vector<4x32xf32>
    %180 = vector.broadcast %33 : vector<1x32xf32> to vector<4x32xf32>
    %181 = arith.addf %179, %180 : vector<4x32xf32>
    %cst_64 = arith.constant dense<0.000000e+00> : vector<4x32xf32>
    %182 = tpu.matmul %178, %29, %cst_64 {dimension_numbers = #tpu.dot_dimension_numbers<[1], [0], [0], [1], [0, 0, 1, 1], [], []>} : vector<4x32xf32>, vector<32x32xf32>, vector<4x32xf32> -> vector<4x32xf32>
    %183 = vector.broadcast %35 : vector<1x32xf32> to vector<4x32xf32>
    %184 = arith.addf %182, %183 : vector<4x32xf32>
    %cst_65 = arith.constant dense<0.000000e+00> : vector<4x32xf32>
    %185 = tpu.matmul %178, %31, %cst_65 {dimension_numbers = #tpu.dot_dimension_numbers<[1], [0], [0], [1], [0, 0, 1, 1], [], []>} : vector<4x32xf32>, vector<32x32xf32>, vector<4x32xf32> -> vector<4x32xf32>
    %186 = vector.broadcast %37 : vector<1x32xf32> to vector<4x32xf32>
    %187 = arith.addf %185, %186 : vector<4x32xf32>
    %188 = vector.extract_strided_slice %9 {offsets = [0, 4, 0], sizes = [4, 1, 32], strides = [1, 1, 1]} : vector<4x8x32xf32> to vector<4x1x32xf32>
    %189 = vector.shape_cast %188 : vector<4x1x32xf32> to vector<4x32xf32>
    %190 = arith.addf %189, %181 : vector<4x32xf32>
    %191 = arith.negf %190 : vector<4x32xf32>
    %192 = math.exp %191 : vector<4x32xf32>
    %cst_66 = arith.constant 1.000000e+00 : f32
    %193 = vector.broadcast %cst_66 : f32 to vector<4x32xf32>
    %194 = arith.addf %193, %192 : vector<4x32xf32>
    %195 = arith.divf %193, %194 : vector<4x32xf32>
    %196 = vector.extract_strided_slice %17 {offsets = [0, 4, 0], sizes = [4, 1, 32], strides = [1, 1, 1]} : vector<4x8x32xf32> to vector<4x1x32xf32>
    %197 = vector.shape_cast %196 : vector<4x1x32xf32> to vector<4x32xf32>
    %198 = arith.addf %197, %184 : vector<4x32xf32>
    %199 = arith.negf %198 : vector<4x32xf32>
    %200 = math.exp %199 : vector<4x32xf32>
    %cst_67 = arith.constant 1.000000e+00 : f32
    %201 = vector.broadcast %cst_67 : f32 to vector<4x32xf32>
    %202 = arith.addf %201, %200 : vector<4x32xf32>
    %203 = arith.divf %201, %202 : vector<4x32xf32>
    %204 = vector.extract_strided_slice %25 {offsets = [0, 4, 0], sizes = [4, 1, 32], strides = [1, 1, 1]} : vector<4x8x32xf32> to vector<4x1x32xf32>
    %205 = vector.shape_cast %204 : vector<4x1x32xf32> to vector<4x32xf32>
    %206 = arith.mulf %195, %187 : vector<4x32xf32>
    %207 = arith.addf %205, %206 : vector<4x32xf32>
    %208 = math.tanh %207 : vector<4x32xf32>
    %cst_68 = arith.constant 1.000000e+00 : f32
    %209 = vector.broadcast %cst_68 : f32 to vector<4x32xf32>
    %210 = arith.subf %209, %203 : vector<4x32xf32>
    %211 = arith.mulf %210, %208 : vector<4x32xf32>
    %212 = arith.mulf %203, %178 : vector<4x32xf32>
    %213 = arith.addf %211, %212 : vector<4x32xf32>
    %cst_69 = arith.constant dense<0.000000e+00> : vector<4x32xf32>
    %214 = tpu.matmul %213, %27, %cst_69 {dimension_numbers = #tpu.dot_dimension_numbers<[1], [0], [0], [1], [0, 0, 1, 1], [], []>} : vector<4x32xf32>, vector<32x32xf32>, vector<4x32xf32> -> vector<4x32xf32>
    %215 = vector.broadcast %33 : vector<1x32xf32> to vector<4x32xf32>
    %216 = arith.addf %214, %215 : vector<4x32xf32>
    %cst_70 = arith.constant dense<0.000000e+00> : vector<4x32xf32>
    %217 = tpu.matmul %213, %29, %cst_70 {dimension_numbers = #tpu.dot_dimension_numbers<[1], [0], [0], [1], [0, 0, 1, 1], [], []>} : vector<4x32xf32>, vector<32x32xf32>, vector<4x32xf32> -> vector<4x32xf32>
    %218 = vector.broadcast %35 : vector<1x32xf32> to vector<4x32xf32>
    %219 = arith.addf %217, %218 : vector<4x32xf32>
    %cst_71 = arith.constant dense<0.000000e+00> : vector<4x32xf32>
    %220 = tpu.matmul %213, %31, %cst_71 {dimension_numbers = #tpu.dot_dimension_numbers<[1], [0], [0], [1], [0, 0, 1, 1], [], []>} : vector<4x32xf32>, vector<32x32xf32>, vector<4x32xf32> -> vector<4x32xf32>
    %221 = vector.broadcast %37 : vector<1x32xf32> to vector<4x32xf32>
    %222 = arith.addf %220, %221 : vector<4x32xf32>
    %223 = vector.extract_strided_slice %9 {offsets = [0, 5, 0], sizes = [4, 1, 32], strides = [1, 1, 1]} : vector<4x8x32xf32> to vector<4x1x32xf32>
    %224 = vector.shape_cast %223 : vector<4x1x32xf32> to vector<4x32xf32>
    %225 = arith.addf %224, %216 : vector<4x32xf32>
    %226 = arith.negf %225 : vector<4x32xf32>
    %227 = math.exp %226 : vector<4x32xf32>
    %cst_72 = arith.constant 1.000000e+00 : f32
    %228 = vector.broadcast %cst_72 : f32 to vector<4x32xf32>
    %229 = arith.addf %228, %227 : vector<4x32xf32>
    %230 = arith.divf %228, %229 : vector<4x32xf32>
    %231 = vector.extract_strided_slice %17 {offsets = [0, 5, 0], sizes = [4, 1, 32], strides = [1, 1, 1]} : vector<4x8x32xf32> to vector<4x1x32xf32>
    %232 = vector.shape_cast %231 : vector<4x1x32xf32> to vector<4x32xf32>
    %233 = arith.addf %232, %219 : vector<4x32xf32>
    %234 = arith.negf %233 : vector<4x32xf32>
    %235 = math.exp %234 : vector<4x32xf32>
    %cst_73 = arith.constant 1.000000e+00 : f32
    %236 = vector.broadcast %cst_73 : f32 to vector<4x32xf32>
    %237 = arith.addf %236, %235 : vector<4x32xf32>
    %238 = arith.divf %236, %237 : vector<4x32xf32>
    %239 = vector.extract_strided_slice %25 {offsets = [0, 5, 0], sizes = [4, 1, 32], strides = [1, 1, 1]} : vector<4x8x32xf32> to vector<4x1x32xf32>
    %240 = vector.shape_cast %239 : vector<4x1x32xf32> to vector<4x32xf32>
    %241 = arith.mulf %230, %222 : vector<4x32xf32>
    %242 = arith.addf %240, %241 : vector<4x32xf32>
    %243 = math.tanh %242 : vector<4x32xf32>
    %cst_74 = arith.constant 1.000000e+00 : f32
    %244 = vector.broadcast %cst_74 : f32 to vector<4x32xf32>
    %245 = arith.subf %244, %238 : vector<4x32xf32>
    %246 = arith.mulf %245, %243 : vector<4x32xf32>
    %247 = arith.mulf %238, %213 : vector<4x32xf32>
    %248 = arith.addf %246, %247 : vector<4x32xf32>
    %cst_75 = arith.constant dense<0.000000e+00> : vector<4x32xf32>
    %249 = tpu.matmul %248, %27, %cst_75 {dimension_numbers = #tpu.dot_dimension_numbers<[1], [0], [0], [1], [0, 0, 1, 1], [], []>} : vector<4x32xf32>, vector<32x32xf32>, vector<4x32xf32> -> vector<4x32xf32>
    %250 = vector.broadcast %33 : vector<1x32xf32> to vector<4x32xf32>
    %251 = arith.addf %249, %250 : vector<4x32xf32>
    %cst_76 = arith.constant dense<0.000000e+00> : vector<4x32xf32>
    %252 = tpu.matmul %248, %29, %cst_76 {dimension_numbers = #tpu.dot_dimension_numbers<[1], [0], [0], [1], [0, 0, 1, 1], [], []>} : vector<4x32xf32>, vector<32x32xf32>, vector<4x32xf32> -> vector<4x32xf32>
    %253 = vector.broadcast %35 : vector<1x32xf32> to vector<4x32xf32>
    %254 = arith.addf %252, %253 : vector<4x32xf32>
    %cst_77 = arith.constant dense<0.000000e+00> : vector<4x32xf32>
    %255 = tpu.matmul %248, %31, %cst_77 {dimension_numbers = #tpu.dot_dimension_numbers<[1], [0], [0], [1], [0, 0, 1, 1], [], []>} : vector<4x32xf32>, vector<32x32xf32>, vector<4x32xf32> -> vector<4x32xf32>
    %256 = vector.broadcast %37 : vector<1x32xf32> to vector<4x32xf32>
    %257 = arith.addf %255, %256 : vector<4x32xf32>
    %258 = vector.extract_strided_slice %9 {offsets = [0, 6, 0], sizes = [4, 1, 32], strides = [1, 1, 1]} : vector<4x8x32xf32> to vector<4x1x32xf32>
    %259 = vector.shape_cast %258 : vector<4x1x32xf32> to vector<4x32xf32>
    %260 = arith.addf %259, %251 : vector<4x32xf32>
    %261 = arith.negf %260 : vector<4x32xf32>
    %262 = math.exp %261 : vector<4x32xf32>
    %cst_78 = arith.constant 1.000000e+00 : f32
    %263 = vector.broadcast %cst_78 : f32 to vector<4x32xf32>
    %264 = arith.addf %263, %262 : vector<4x32xf32>
    %265 = arith.divf %263, %264 : vector<4x32xf32>
    %266 = vector.extract_strided_slice %17 {offsets = [0, 6, 0], sizes = [4, 1, 32], strides = [1, 1, 1]} : vector<4x8x32xf32> to vector<4x1x32xf32>
    %267 = vector.shape_cast %266 : vector<4x1x32xf32> to vector<4x32xf32>
    %268 = arith.addf %267, %254 : vector<4x32xf32>
    %269 = arith.negf %268 : vector<4x32xf32>
    %270 = math.exp %269 : vector<4x32xf32>
    %cst_79 = arith.constant 1.000000e+00 : f32
    %271 = vector.broadcast %cst_79 : f32 to vector<4x32xf32>
    %272 = arith.addf %271, %270 : vector<4x32xf32>
    %273 = arith.divf %271, %272 : vector<4x32xf32>
    %274 = vector.extract_strided_slice %25 {offsets = [0, 6, 0], sizes = [4, 1, 32], strides = [1, 1, 1]} : vector<4x8x32xf32> to vector<4x1x32xf32>
    %275 = vector.shape_cast %274 : vector<4x1x32xf32> to vector<4x32xf32>
    %276 = arith.mulf %265, %257 : vector<4x32xf32>
    %277 = arith.addf %275, %276 : vector<4x32xf32>
    %278 = math.tanh %277 : vector<4x32xf32>
    %cst_80 = arith.constant 1.000000e+00 : f32
    %279 = vector.broadcast %cst_80 : f32 to vector<4x32xf32>
    %280 = arith.subf %279, %273 : vector<4x32xf32>
    %281 = arith.mulf %280, %278 : vector<4x32xf32>
    %282 = arith.mulf %273, %248 : vector<4x32xf32>
    %283 = arith.addf %281, %282 : vector<4x32xf32>
    %cst_81 = arith.constant dense<0.000000e+00> : vector<4x32xf32>
    %284 = tpu.matmul %283, %27, %cst_81 {dimension_numbers = #tpu.dot_dimension_numbers<[1], [0], [0], [1], [0, 0, 1, 1], [], []>} : vector<4x32xf32>, vector<32x32xf32>, vector<4x32xf32> -> vector<4x32xf32>
    %285 = vector.broadcast %33 : vector<1x32xf32> to vector<4x32xf32>
    %286 = arith.addf %284, %285 : vector<4x32xf32>
    %cst_82 = arith.constant dense<0.000000e+00> : vector<4x32xf32>
    %287 = tpu.matmul %283, %29, %cst_82 {dimension_numbers = #tpu.dot_dimension_numbers<[1], [0], [0], [1], [0, 0, 1, 1], [], []>} : vector<4x32xf32>, vector<32x32xf32>, vector<4x32xf32> -> vector<4x32xf32>
    %288 = vector.broadcast %35 : vector<1x32xf32> to vector<4x32xf32>
    %289 = arith.addf %287, %288 : vector<4x32xf32>
    %cst_83 = arith.constant dense<0.000000e+00> : vector<4x32xf32>
    %290 = tpu.matmul %283, %31, %cst_83 {dimension_numbers = #tpu.dot_dimension_numbers<[1], [0], [0], [1], [0, 0, 1, 1], [], []>} : vector<4x32xf32>, vector<32x32xf32>, vector<4x32xf32> -> vector<4x32xf32>
    %291 = vector.broadcast %37 : vector<1x32xf32> to vector<4x32xf32>
    %292 = arith.addf %290, %291 : vector<4x32xf32>
    %293 = vector.extract_strided_slice %9 {offsets = [0, 7, 0], sizes = [4, 1, 32], strides = [1, 1, 1]} : vector<4x8x32xf32> to vector<4x1x32xf32>
    %294 = vector.shape_cast %293 : vector<4x1x32xf32> to vector<4x32xf32>
    %295 = arith.addf %294, %286 : vector<4x32xf32>
    %296 = arith.negf %295 : vector<4x32xf32>
    %297 = math.exp %296 : vector<4x32xf32>
    %cst_84 = arith.constant 1.000000e+00 : f32
    %298 = vector.broadcast %cst_84 : f32 to vector<4x32xf32>
    %299 = arith.addf %298, %297 : vector<4x32xf32>
    %300 = arith.divf %298, %299 : vector<4x32xf32>
    %301 = vector.extract_strided_slice %17 {offsets = [0, 7, 0], sizes = [4, 1, 32], strides = [1, 1, 1]} : vector<4x8x32xf32> to vector<4x1x32xf32>
    %302 = vector.shape_cast %301 : vector<4x1x32xf32> to vector<4x32xf32>
    %303 = arith.addf %302, %289 : vector<4x32xf32>
    %304 = arith.negf %303 : vector<4x32xf32>
    %305 = math.exp %304 : vector<4x32xf32>
    %cst_85 = arith.constant 1.000000e+00 : f32
    %306 = vector.broadcast %cst_85 : f32 to vector<4x32xf32>
    %307 = arith.addf %306, %305 : vector<4x32xf32>
    %308 = arith.divf %306, %307 : vector<4x32xf32>
    %309 = vector.extract_strided_slice %25 {offsets = [0, 7, 0], sizes = [4, 1, 32], strides = [1, 1, 1]} : vector<4x8x32xf32> to vector<4x1x32xf32>
    %310 = vector.shape_cast %309 : vector<4x1x32xf32> to vector<4x32xf32>
    %311 = arith.mulf %300, %292 : vector<4x32xf32>
    %312 = arith.addf %310, %311 : vector<4x32xf32>
    %313 = math.tanh %312 : vector<4x32xf32>
    %cst_86 = arith.constant 1.000000e+00 : f32
    %314 = vector.broadcast %cst_86 : f32 to vector<4x32xf32>
    %315 = arith.subf %314, %308 : vector<4x32xf32>
    %316 = arith.mulf %315, %313 : vector<4x32xf32>
    %317 = arith.mulf %308, %283 : vector<4x32xf32>
    %318 = arith.addf %316, %317 : vector<4x32xf32>
    %c0_87 = arith.constant 0 : index
    %c0_88 = arith.constant 0 : index
    %319 = vector.load %arg5[%c0_87, %c0_88] : memref<32x24xf32, #tpu.memory_space<vmem>>, vector<32x24xf32>
    %cst_89 = arith.constant dense<0.000000e+00> : vector<4x24xf32>
    %320 = tpu.matmul %318, %319, %cst_89 {dimension_numbers = #tpu.dot_dimension_numbers<[1], [0], [0], [1], [0, 0, 1, 1], [], []>} : vector<4x32xf32>, vector<32x24xf32>, vector<4x24xf32> -> vector<4x24xf32>
    %c0_90 = arith.constant 0 : index
    %c0_91 = arith.constant 0 : index
    %321 = vector.load %arg6[%c0_90, %c0_91] : memref<1x24xf32, #tpu.memory_space<vmem>>, vector<1x24xf32>
    %322 = vector.broadcast %321 : vector<1x24xf32> to vector<4x24xf32>
    %323 = arith.addf %320, %322 : vector<4x24xf32>
    %324 = vector.extract_strided_slice %323 {offsets = [0, 0], sizes = [4, 8], strides = [1, 1]} : vector<4x24xf32> to vector<4x8xf32>
    %c0_92 = arith.constant 0 : index
    %c0_93 = arith.constant 0 : index
    %c0_94 = arith.constant 0 : index
    %325 = vector.load %arg7[%c0_92, %c0_93, %c0_94] : memref<3x4x8xf32, #tpu.memory_space<vmem>>, vector<1x4x8xf32>
    %326 = vector.shape_cast %325 : vector<1x4x8xf32> to vector<4x8xf32>
    %327 = vector.shape_cast %324 : vector<4x8xf32> to vector<1x4x8xf32>
    tpu.vector_store %arg7[%c0_92, %c0_93, %c0_94], %327 {strides = array<i32>} : memref<3x4x8xf32, #tpu.memory_space<vmem>>, vector<1x4x8xf32>,
    %cst_95 = arith.constant dense<0xFF800000> : vector<4xf32>
    %328 = vector.multi_reduction <maximumf>, %324, %cst_95 [1] : vector<4x8xf32> to vector<4xf32>
    %329 = vector.shape_cast %328 : vector<4xf32> to vector<4x1xf32>
    %330 = vector.broadcast %329 : vector<4x1xf32> to vector<4x8xf32>
    %331 = arith.subf %324, %330 : vector<4x8xf32>
    %332 = math.exp %331 : vector<4x8xf32>
    %cst_96 = arith.constant dense<0.000000e+00> : vector<4xf32>
    %333 = vector.multi_reduction <add>, %332, %cst_96 [1] : vector<4x8xf32> to vector<4xf32>
    %334 = vector.shape_cast %333 : vector<4xf32> to vector<4x1xf32>
    %335 = tpu.reciprocal %334 {approx = true} : vector<4x1xf32> -> vector<4x1xf32>
    %336 = vector.broadcast %335 : vector<4x1xf32> to vector<4x8xf32>
    %337 = arith.mulf %332, %336 : vector<4x8xf32>
    %c0_97 = arith.constant 0 : index
    %c0_98 = arith.constant 0 : index
    %c0_99 = arith.constant 0 : index
    %338 = vector.load %arg8[%c0_97, %c0_98, %c0_99] : memref<3x4x8xf32, #tpu.memory_space<vmem>>, vector<1x4x8xf32>
    %339 = vector.shape_cast %338 : vector<1x4x8xf32> to vector<4x8xf32>
    %340 = vector.shape_cast %337 : vector<4x8xf32> to vector<1x4x8xf32>
    tpu.vector_store %arg8[%c0_97, %c0_98, %c0_99], %340 {strides = array<i32>} : memref<3x4x8xf32, #tpu.memory_space<vmem>>, vector<1x4x8xf32>,
    %341 = vector.extract_strided_slice %323 {offsets = [0, 8], sizes = [4, 8], strides = [1, 1]} : vector<4x24xf32> to vector<4x8xf32>
    %c1_100 = arith.constant 1 : index
    %c0_101 = arith.constant 0 : index
    %c0_102 = arith.constant 0 : index
    %342 = vector.load %arg7[%c1_100, %c0_101, %c0_102] : memref<3x4x8xf32, #tpu.memory_space<vmem>>, vector<1x4x8xf32>
    %343 = vector.shape_cast %342 : vector<1x4x8xf32> to vector<4x8xf32>
    %344 = vector.shape_cast %341 : vector<4x8xf32> to vector<1x4x8xf32>
    tpu.vector_store %arg7[%c1_100, %c0_101, %c0_102], %344 {strides = array<i32>} : memref<3x4x8xf32, #tpu.memory_space<vmem>>, vector<1x4x8xf32>,
    %cst_103 = arith.constant dense<0xFF800000> : vector<4xf32>
    %345 = vector.multi_reduction <maximumf>, %341, %cst_103 [1] : vector<4x8xf32> to vector<4xf32>
    %346 = vector.shape_cast %345 : vector<4xf32> to vector<4x1xf32>
    %347 = vector.broadcast %346 : vector<4x1xf32> to vector<4x8xf32>
    %348 = arith.subf %341, %347 : vector<4x8xf32>
    %349 = math.exp %348 : vector<4x8xf32>
    %cst_104 = arith.constant dense<0.000000e+00> : vector<4xf32>
    %350 = vector.multi_reduction <add>, %349, %cst_104 [1] : vector<4x8xf32> to vector<4xf32>
    %351 = vector.shape_cast %350 : vector<4xf32> to vector<4x1xf32>
    %352 = tpu.reciprocal %351 {approx = true} : vector<4x1xf32> -> vector<4x1xf32>
    %353 = vector.broadcast %352 : vector<4x1xf32> to vector<4x8xf32>
    %354 = arith.mulf %349, %353 : vector<4x8xf32>
    %c1_105 = arith.constant 1 : index
    %c0_106 = arith.constant 0 : index
    %c0_107 = arith.constant 0 : index
    %355 = vector.load %arg8[%c1_105, %c0_106, %c0_107] : memref<3x4x8xf32, #tpu.memory_space<vmem>>, vector<1x4x8xf32>
    %356 = vector.shape_cast %355 : vector<1x4x8xf32> to vector<4x8xf32>
    %357 = vector.shape_cast %354 : vector<4x8xf32> to vector<1x4x8xf32>
    tpu.vector_store %arg8[%c1_105, %c0_106, %c0_107], %357 {strides = array<i32>} : memref<3x4x8xf32, #tpu.memory_space<vmem>>, vector<1x4x8xf32>,
    %358 = vector.extract_strided_slice %323 {offsets = [0, 16], sizes = [4, 8], strides = [1, 1]} : vector<4x24xf32> to vector<4x8xf32>
    %c2_108 = arith.constant 2 : index
    %c0_109 = arith.constant 0 : index
    %c0_110 = arith.constant 0 : index
    %359 = vector.load %arg7[%c2_108, %c0_109, %c0_110] : memref<3x4x8xf32, #tpu.memory_space<vmem>>, vector<1x4x8xf32>
    %360 = vector.shape_cast %359 : vector<1x4x8xf32> to vector<4x8xf32>
    %361 = vector.shape_cast %358 : vector<4x8xf32> to vector<1x4x8xf32>
    tpu.vector_store %arg7[%c2_108, %c0_109, %c0_110], %361 {strides = array<i32>} : memref<3x4x8xf32, #tpu.memory_space<vmem>>, vector<1x4x8xf32>,
    %cst_111 = arith.constant dense<0xFF800000> : vector<4xf32>
    %362 = vector.multi_reduction <maximumf>, %358, %cst_111 [1] : vector<4x8xf32> to vector<4xf32>
    %363 = vector.shape_cast %362 : vector<4xf32> to vector<4x1xf32>
    %364 = vector.broadcast %363 : vector<4x1xf32> to vector<4x8xf32>
    %365 = arith.subf %358, %364 : vector<4x8xf32>
    %366 = math.exp %365 : vector<4x8xf32>
    %cst_112 = arith.constant dense<0.000000e+00> : vector<4xf32>
    %367 = vector.multi_reduction <add>, %366, %cst_112 [1] : vector<4x8xf32> to vector<4xf32>
    %368 = vector.shape_cast %367 : vector<4xf32> to vector<4x1xf32>
    %369 = tpu.reciprocal %368 {approx = true} : vector<4x1xf32> -> vector<4x1xf32>
    %370 = vector.broadcast %369 : vector<4x1xf32> to vector<4x8xf32>
    %371 = arith.mulf %366, %370 : vector<4x8xf32>
    %c2_113 = arith.constant 2 : index
    %c0_114 = arith.constant 0 : index
    %c0_115 = arith.constant 0 : index
    %372 = vector.load %arg8[%c2_113, %c0_114, %c0_115] : memref<3x4x8xf32, #tpu.memory_space<vmem>>, vector<1x4x8xf32>
    %373 = vector.shape_cast %372 : vector<1x4x8xf32> to vector<4x8xf32>
    %374 = vector.shape_cast %371 : vector<4x8xf32> to vector<1x4x8xf32>
    tpu.vector_store %arg8[%c2_113, %c0_114, %c0_115], %374 {strides = array<i32>} : memref<3x4x8xf32, #tpu.memory_space<vmem>>, vector<1x4x8xf32>,
    return
  }
}

</mosaic_0001>

<llo_original>
// kernel: single_model_forward.1
$region0: #{single_model_forward.1}
  #allocation0 [shape = 'u32[]', space=smem, size = 0x4, offset = 0x4, fixed_abs, tag = 'smem constant byte address 0x4 - core index']
  #allocation1 [shape = 'u32[72,128]{1,0:T(1,128)}', space=vmem, size = 0x9000, scoped, tag = 'internal scratch']
  %s0 = inlined_call_operand.hbm [shape: f32[4,8,16], index: 0, kind: input, shape index: {}]
  %s1 = inlined_call_operand.vmem [shape: f32[3,16,32], index: 1, kind: input, shape index: {}]
  %s2 = inlined_call_operand.hbm [shape: f32[3,32,32], index: 2, kind: input, shape index: {}]
  %s3 = inlined_call_operand.vmem [shape: f32[3,1,32], index: 3, kind: input, shape index: {}]
  %s4 = inlined_call_operand.vmem [shape: f32[3,1,32], index: 4, kind: input, shape index: {}]
  %s5 = inlined_call_operand.vmem [shape: f32[32,24], index: 5, kind: input, shape index: {}]
  %s6 = inlined_call_operand.vmem [shape: f32[1,24], index: 6, kind: input, shape index: {}]
  %s7 = inlined_call_operand.vmem [shape: f32[3,4,8], index: 7, kind: output, shape index: {0}]
  %s8 = inlined_call_operand.hbm [shape: f32[3,4,8], index: 8, kind: output, shape index: {1}]
  %9 = xla_tuple %s7, %s8
  %s10 = sld [smem:[#allocation0]]
  $region54: #{single_model_forward.1} parent=0
    _
  %s12 = ssub.s32 1, %s10
  %s13 = scalar_select 0, %s12, %s10
  $region1: #{single_model_forward.1} parent=0
    #allocation2 [shape = 'u8[16384]{0}', space=vmem, size = 0x4000, scoped, tag = 'input window, operand 0, single buffered']
    #allocation3 [shape = 's32[1]{0}', space=sflag, size = 0x4, scoped, tag = 'scoped memory for single_model_forward.1']
    #allocation4 [shape = 's32[1]{0}', space=sflag, size = 0x4, scoped, tag = 'scoped memory for single_model_forward.1']
    #allocation5 [shape = 'u8[49152]{0}', space=vmem, size = 0xc000, scoped, tag = 'input window, operand 2, single buffered']
    #allocation6 [shape = 's32[1]{0}', space=sflag, size = 0x4, scoped, tag = 'scoped memory for single_model_forward.1']
    #allocation7 [shape = 'u8[6144]{0}', space=vmem, size = 0x1800, scoped, tag = 'output window, operand 1, single buffered']
    %14 = vsyncpa [#allocation3], 0
    %15 = vsyncpa [#allocation6], 0
    %16 = vsyncpa [#allocation4], 0
    // Predicated region
    $region2: #{single_model_forward.1} parent=1 // pred_check
      _
    $region3: #{single_model_forward.1} parent=1 // pred_check_branch
      %18 = sbr.rel (0) target = $region5
    $region4: #{single_model_forward.1} parent=1 // pred_region
      %20 = vsyncadd [#allocation3], 0
      %s21 = sshll.u32 %s0, 4
      %s22 = int_to_ptr.hbm [resolvable:$true] %s21
      %s23 = sshll.u32 [#allocation2], 4
      %s24 = int_to_ptr.vmem [resolvable:$true] %s23
      %29 = dma.hbm_to_vmem [thread:$0]  %s22, 512, %s24, [#allocation3], 128, 128, 8
    $region5: #{single_model_forward.1} parent=1 // pred_fallthru
      _
    // Predicated region
    $region6: #{single_model_forward.1} parent=1 // pred_check
      _
    $region7: #{single_model_forward.1} parent=1 // pred_check_branch
      %31 = sbr.rel (0) target = $region9
    $region8: #{single_model_forward.1} parent=1 // pred_region
      _
    $region9: #{single_model_forward.1} parent=1 // pred_fallthru
      _
    // Predicated region
    $region10: #{single_model_forward.1} parent=1 // pred_check
      _
    $region11: #{single_model_forward.1} parent=1 // pred_check_branch
      %33 = sbr.rel (0) target = $region13
    $region12: #{single_model_forward.1} parent=1 // pred_region
      %35 = vsyncadd [#allocation6], 0
      %s36 = sshll.u32 %s2, 4
      %s37 = int_to_ptr.hbm [resolvable:$true] %s36
      %s38 = sshll.u32 [#allocation5], 4
      %s39 = int_to_ptr.vmem [resolvable:$true] %s38
      %44 = dma.hbm_to_vmem [thread:$0]  %s37, 1536, %s39, [#allocation6], 128, 128, 8
    $region13: #{single_model_forward.1} parent=1 // pred_fallthru
      _
    // Predicated region
    $region14: #{single_model_forward.1} parent=1 // pred_check
      _
    $region15: #{single_model_forward.1} parent=1 // pred_check_branch
      %46 = sbr.rel (0) target = $region17
    $region16: #{single_model_forward.1} parent=1 // pred_region
      _
    $region17: #{single_model_forward.1} parent=1 // pred_fallthru
      _
    // Predicated region
    $region18: #{single_model_forward.1} parent=1 // pred_check
      _
    $region19: #{single_model_forward.1} parent=1 // pred_check_branch
      %48 = sbr.rel (0) target = $region21
    $region20: #{single_model_forward.1} parent=1 // pred_region
      _
    $region21: #{single_model_forward.1} parent=1 // pred_fallthru
      _
    // Predicated region
    $region22: #{single_model_forward.1} parent=1 // pred_check
      _
    $region23: #{single_model_forward.1} parent=1 // pred_check_branch
      %50 = sbr.rel (0) target = $region25
    $region24: #{single_model_forward.1} parent=1 // pred_region
      _
    $region25: #{single_model_forward.1} parent=1 // pred_fallthru
      _
    // Predicated region
    $region26: #{single_model_forward.1} parent=1 // pred_check
      _
    $region27: #{single_model_forward.1} parent=1 // pred_check_branch
      %52 = sbr.rel (0) target = $region29
    $region28: #{single_model_forward.1} parent=1 // pred_region
      _
    $region29: #{single_model_forward.1} parent=1 // pred_fallthru
      _
    // Predicated region
    $region30: #{single_model_forward.1} parent=1 // pred_check
      _
    $region31: #{single_model_forward.1} parent=1 // pred_check_branch
      %54 = sbr.rel (0) target = $region33
    $region32: #{single_model_forward.1} parent=1 // pred_region
      %56 = dma.done [#allocation3], 512
    $region33: #{single_model_forward.1} parent=1 // pred_fallthru
      _
    // Predicated region
    $region34: #{single_model_forward.1} parent=1 // pred_check
      _
    $region35: #{single_model_forward.1} parent=1 // pred_check_branch
      %58 = sbr.rel (0) target = $region37
    $region36: #{single_model_forward.1} parent=1 // pred_region
      %60 = dma.done [#allocation6], 1536
    $region37: #{single_model_forward.1} parent=1 // pred_fallthru
      _
    %v61 = vld [vmem:[#allocation2] sm:$0xff]
    %v62 = vld [vmem:[#allocation2 + $0x8] sm:$0xff]
    %v63 = vld [vmem:[#allocation2 + $0x10] sm:$0xff]
    %v64 = vld [vmem:[#allocation2 + $0x18] sm:$0xff]
    %v65 = vld [vmem:[%s1] sm:$0xff]
    %v66 = vld [vmem:[%s1 + $0x8] sm:$0xff]
    %v67 = vld [vmem:[%s3] sm:$0x1]
    %v69 = vperm.slane %v67, 0
    %vm71 = vcmask 130048
    %v73 = vsel %vm71, %v61, 0
    %v76 = vsel %vm71, %v62, 0
    %v79 = vsel %vm71, %v63, 0
    %v82 = vsel %vm71, %v64, 0
    %84 = vmatpush.msra.mxu0 0.0
    %85 = vmatpush.msra.mxu0 0.0
    %86 = vmatpush.msra.mxu0 0.0
    %87 = vmatpush.msra.mxu0 0.0
    %88 = vmatpush.msra.mxu0 0.0
    %89 = vmatpush.msra.mxu0 0.0
    %90 = vmatpush.msra.mxu0 0.0
    %91 = vmatpush.msra.mxu0 0.0
    %92 = vmatpush.msra.mxu0 0.0
    %93 = vmatpush.msra.mxu0 0.0
    %94 = vmatpush.msra.mxu0 0.0
    %95 = vmatpush.msra.mxu0 0.0
    %96 = vmatpush.msra.mxu0 0.0
    %97 = vmatpush.msra.mxu0 0.0
    %98 = vmatpush.msra.mxu0 %v66
    %99 = vmatpush.msra.mxu0 %v65
    %100 = vmatmul.f32.gmra.mxu0 %v73
    %v101 = vpop.f32.mrf.mxu0
    %v102 = vadd.f32 %v69, %v101
    %103 = vmatmul.f32.gmra.mxu0 %v76
    %v104 = vpop.f32.mrf.mxu0
    %v105 = vadd.f32 %v69, %v104
    %106 = vmatmul.f32.gmra.mxu0 %v79
    %v107 = vpop.f32.mrf.mxu0
    %v108 = vadd.f32 %v69, %v107
    %109 = vmatmul.f32.gmra.mxu0 %v82
    %v110 = vpop.f32.mrf.mxu0
    %v111 = vadd.f32 %v69, %v110
    %112 = vdwg.mxu0
    %s113 = scalar_lea.vmem %s1, 16
    %v114 = vld [vmem:[%s113] sm:$0xff]
    %v115 = vld [vmem:[%s113 + $0x8] sm:$0xff]
    %s116 = scalar_lea.vmem %s3, 1
    %v117 = vld [vmem:[%s116] sm:$0x1]
    %v119 = vperm.slane %v117, 0
    %121 = vmatpush.msra.mxu0 0.0
    %122 = vmatpush.msra.mxu0 0.0
    %123 = vmatpush.msra.mxu0 0.0
    %124 = vmatpush.msra.mxu0 0.0
    %125 = vmatpush.msra.mxu0 0.0
    %126 = vmatpush.msra.mxu0 0.0
    %127 = vmatpush.msra.mxu0 0.0
    %128 = vmatpush.msra.mxu0 0.0
    %129 = vmatpush.msra.mxu0 0.0
    %130 = vmatpush.msra.mxu0 0.0
    %131 = vmatpush.msra.mxu0 0.0
    %132 = vmatpush.msra.mxu0 0.0
    %133 = vmatpush.msra.mxu0 0.0
    %134 = vmatpush.msra.mxu0 0.0
    %135 = vmatpush.msra.mxu0 %v115
    %136 = vmatpush.msra.mxu0 %v114
    %137 = vmatmul.f32.gmra.mxu0 %v73
    %v138 = vpop.f32.mrf.mxu0
    %v139 = vadd.f32 %v119, %v138
    %140 = vmatmul.f32.gmra.mxu0 %v76
    %v141 = vpop.f32.mrf.mxu0
    %v142 = vadd.f32 %v119, %v141
    %143 = vmatmul.f32.gmra.mxu0 %v79
    %v144 = vpop.f32.mrf.mxu0
    %v145 = vadd.f32 %v119, %v144
    %146 = vmatmul.f32.gmra.mxu0 %v82
    %v147 = vpop.f32.mrf.mxu0
    %v148 = vadd.f32 %v119, %v147
    %149 = vdwg.mxu0
    %s150 = scalar_lea.vmem %s1, 32
    %v151 = vld [vmem:[%s150] sm:$0xff]
    %v152 = vld [vmem:[%s150 + $0x8] sm:$0xff]
    %s153 = scalar_lea.vmem %s3, 2
    %v154 = vld [vmem:[%s153] sm:$0x1]
    %v156 = vperm.slane %v154, 0
    %158 = vmatpush.msra.mxu0 0.0
    %159 = vmatpush.msra.mxu0 0.0
    %160 = vmatpush.msra.mxu0 0.0
    %161 = vmatpush.msra.mxu0 0.0
    %162 = vmatpush.msra.mxu0 0.0
    %163 = vmatpush.msra.mxu0 0.0
    %164 = vmatpush.msra.mxu0 0.0
    %165 = vmatpush.msra.mxu0 0.0
    %166 = vmatpush.msra.mxu0 0.0
    %167 = vmatpush.msra.mxu0 0.0
    %168 = vmatpush.msra.mxu0 0.0
    %169 = vmatpush.msra.mxu0 0.0
    %170 = vmatpush.msra.mxu0 0.0
    %171 = vmatpush.msra.mxu0 0.0
    %172 = vmatpush.msra.mxu0 %v152
    %173 = vmatpush.msra.mxu0 %v151
    %174 = vmatmul.f32.gmra.mxu0 %v73
    %v175 = vpop.f32.mrf.mxu0
    %v176 = vadd.f32 %v156, %v175
    %177 = vmatmul.f32.gmra.mxu0 %v76
    %v178 = vpop.f32.mrf.mxu0
    %v179 = vadd.f32 %v156, %v178
    %180 = vmatmul.f32.gmra.mxu0 %v79
    %v181 = vpop.f32.mrf.mxu0
    %v182 = vadd.f32 %v156, %v181
    %183 = vmatmul.f32.gmra.mxu0 %v82
    %v184 = vpop.f32.mrf.mxu0
    %v185 = vadd.f32 %v156, %v184
    %186 = vdwg.mxu0
    %v187 = vld [vmem:[#allocation5] sm:$0xff]
    %v188 = vld [vmem:[#allocation5 + $0x8] sm:$0xff]
    %v189 = vld [vmem:[#allocation5 + $0x10] sm:$0xff]
    %v190 = vld [vmem:[#allocation5 + $0x18] sm:$0xff]
    %s191 = scalar_lea.vmem [#allocation5], 32
    %v192 = vld [vmem:[%s191] sm:$0xff]
    %v193 = vld [vmem:[%s191 + $0x8] sm:$0xff]
    %v194 = vld [vmem:[%s191 + $0x10] sm:$0xff]
    %v195 = vld [vmem:[%s191 + $0x18] sm:$0xff]
    %s196 = scalar_lea.vmem [#allocation5], 64
    %v197 = vld [vmem:[%s196] sm:$0xff]
    %v198 = vld [vmem:[%s196 + $0x8] sm:$0xff]
    %v199 = vld [vmem:[%s196 + $0x10] sm:$0xff]
    %v200 = vld [vmem:[%s196 + $0x18] sm:$0xff]
    %v201 = vld [vmem:[%s4] sm:$0x1]
    %s202 = scalar_lea.vmem %s4, 1
    %v203 = vld [vmem:[%s202] sm:$0x1]
    %s204 = scalar_lea.vmem %s4, 2
    %v205 = vld [vmem:[%s204] sm:$0x1]
    %v207 = vperm.slane %v201, 0
    %vm209 = vcmask 261120
    %v211 = vsel %vm209, 0.0, 0
    %213 = vmatpush.msra.mxu0 0.0
    %214 = vmatpush.msra.mxu0 0.0
    %215 = vmatpush.msra.mxu0 0.0
    %216 = vmatpush.msra.mxu0 0.0
    %217 = vmatpush.msra.mxu0 0.0
    %218 = vmatpush.msra.mxu0 0.0
    %219 = vmatpush.msra.mxu0 0.0
    %220 = vmatpush.msra.mxu0 0.0
    %221 = vmatpush.msra.mxu0 0.0
    %222 = vmatpush.msra.mxu0 0.0
    %223 = vmatpush.msra.mxu0 0.0
    %224 = vmatpush.msra.mxu0 0.0
    %225 = vmatpush.msra.mxu0 %v190
    %226 = vmatpush.msra.mxu0 %v189
    %227 = vmatpush.msra.mxu0 %v188
    %228 = vmatpush.msra.mxu0 %v187
    %229 = vmatmul.f32.gmra.mxu0 %v211
    %v230 = vpop.f32.mrf.mxu0
    %v231 = vadd.f32 %v207, %v230
    %232 = vdwg.mxu0
    %v234 = vperm.slane %v203, 0
    %236 = vmatpush.msra.mxu0 0.0
    %237 = vmatpush.msra.mxu0 0.0
    %238 = vmatpush.msra.mxu0 0.0
    %239 = vmatpush.msra.mxu0 0.0
    %240 = vmatpush.msra.mxu0 0.0
    %241 = vmatpush.msra.mxu0 0.0
    %242 = vmatpush.msra.mxu0 0.0
    %243 = vmatpush.msra.mxu0 0.0
    %244 = vmatpush.msra.mxu0 0.0
    %245 = vmatpush.msra.mxu0 0.0
    %246 = vmatpush.msra.mxu0 0.0
    %247 = vmatpush.msra.mxu0 0.0
    %248 = vmatpush.msra.mxu0 %v195
    %249 = vmatpush.msra.mxu0 %v194
    %250 = vmatpush.msra.mxu0 %v193
    %251 = vmatpush.msra.mxu0 %v192
    %252 = vmatmul.f32.gmra.mxu0 %v211
    %v253 = vpop.f32.mrf.mxu0
    %v254 = vadd.f32 %v234, %v253
    %255 = vdwg.mxu0
    %v257 = vperm.slane %v205, 0
    %259 = vmatpush.msra.mxu0 0.0
    %260 = vmatpush.msra.mxu0 0.0
    %261 = vmatpush.msra.mxu0 0.0
    %262 = vmatpush.msra.mxu0 0.0
    %263 = vmatpush.msra.mxu0 0.0
    %264 = vmatpush.msra.mxu0 0.0
    %265 = vmatpush.msra.mxu0 0.0
    %266 = vmatpush.msra.mxu0 0.0
    %267 = vmatpush.msra.mxu0 0.0
    %268 = vmatpush.msra.mxu0 0.0
    %269 = vmatpush.msra.mxu0 0.0
    %270 = vmatpush.msra.mxu0 0.0
    %271 = vmatpush.msra.mxu0 %v200
    %272 = vmatpush.msra.mxu0 %v199
    %273 = vmatpush.msra.mxu0 %v198
    %274 = vmatpush.msra.mxu0 %v197
    %275 = vmatmul.f32.gmra.mxu0 %v211
    %v276 = vpop.f32.mrf.mxu0
    %v277 = vadd.f32 %v257, %v276
    %278 = vdwg.mxu0
    %v280 = vrot.slane %v231, 1
    %v281 = vrot.slane %v231, 2
    %v282 = vrot.slane %v231, 3
    %v287 = vadd.f32 %v102, %v231
    %v288 = vadd.f32 %v105, %v280
    %v289 = vadd.f32 %v108, %v281
    %v290 = vadd.f32 %v111, %v282
    %v291 = vxor.u32 %v287, 2147483648
    %v292 = vxor.u32 %v288, 2147483648
    %v293 = vxor.u32 %v289, 2147483648
    %v294 = vxor.u32 %v290, 2147483648
    %v295 = vmul.f32 %v291, 1.442695
    %v296 = vpow.pop %v295
    %v297 = vmul.f32 %v292, 1.442695
    %v298 = vpow.pop %v297
    %v299 = vmul.f32 %v293, 1.442695
    %v300 = vpow.pop %v299
    %v301 = vmul.f32 %v294, 1.442695
    %v302 = vpow.pop %v301
    %v303 = vadd.f32 %v296, 1.0
    %v304 = vadd.f32 %v298, 1.0
    %v305 = vadd.f32 %v300, 1.0
    %v306 = vadd.f32 %v302, 1.0
    %v307 = vrcp.pop %v303
    %v308 = vmul.f32 %v303, %v307
    %v309 = vsub.f32 1.0, %v308
    %v310 = vmul.f32 %v307, %v309
    %v311 = vadd.f32 %v307, %v310
    %vm312 = vweird.f32 %v303
    %vm313 = vweird.f32 %v307
    %vm314 = vmor %vm312, %vm313
    %v315 = vsel %vm314, %v307, %v311
    %v316 = vand.u32 2147483647, %v303
    %vm317 = vcmp.eq.f32.partialorder %v316, 8.507059e+37
    %v318 = vand.u32 %v303, 2147483648
    %v319 = vor.u32 1.1754944e-38, %v318
    %v320 = vsel %vm317, %v319, %v315
    %v321 = vmul.f32 1.0, %v320
    %v322 = vrcp.pop %v304
    %v323 = vmul.f32 %v304, %v322
    %v324 = vsub.f32 1.0, %v323
    %v325 = vmul.f32 %v322, %v324
    %v326 = vadd.f32 %v322, %v325
    %vm327 = vweird.f32 %v304
    %vm328 = vweird.f32 %v322
    %vm329 = vmor %vm327, %vm328
    %v330 = vsel %vm329, %v322, %v326
    %v331 = vand.u32 2147483647, %v304
    %vm332 = vcmp.eq.f32.partialorder %v331, 8.507059e+37
    %v333 = vand.u32 %v304, 2147483648
    %v334 = vor.u32 1.1754944e-38, %v333
    %v335 = vsel %vm332, %v334, %v330
    %v336 = vmul.f32 1.0, %v335
    %v337 = vrcp.pop %v305
    %v338 = vmul.f32 %v305, %v337
    %v339 = vsub.f32 1.0, %v338
    %v340 = vmul.f32 %v337, %v339
    %v341 = vadd.f32 %v337, %v340
    %vm342 = vweird.f32 %v305
    %vm343 = vweird.f32 %v337
    %vm344 = vmor %vm342, %vm343
    %v345 = vsel %vm344, %v337, %v341
    %v346 = vand.u32 2147483647, %v305
    %vm347 = vcmp.eq.f32.partialorder %v346, 8.507059e+37
    %v348 = vand.u32 %v305, 2147483648
    %v349 = vor.u32 1.1754944e-38, %v348
    %v350 = vsel %vm347, %v349, %v345
    %v351 = vmul.f32 1.0, %v350
    %v352 = vrcp.pop %v306
    %v353 = vmul.f32 %v306, %v352
    %v354 = vsub.f32 1.0, %v353
    %v355 = vmul.f32 %v352, %v354
    %v356 = vadd.f32 %v352, %v355
    %vm357 = vweird.f32 %v306
    %vm358 = vweird.f32 %v352
    %vm359 = vmor %vm357, %vm358
    %v360 = vsel %vm359, %v352, %v356
    %v361 = vand.u32 2147483647, %v306
    %vm362 = vcmp.eq.f32.partialorder %v361, 8.507059e+37
    %v363 = vand.u32 %v306, 2147483648
    %v364 = vor.u32 1.1754944e-38, %v363
    %v365 = vsel %vm362, %v364, %v360
    %v366 = vmul.f32 1.0, %v365
    %v368 = vrot.slane %v254, 1
    %v369 = vrot.slane %v254, 2
    %v370 = vrot.slane %v254, 3
    %v375 = vadd.f32 %v139, %v254
    %v376 = vadd.f32 %v142, %v368
    %v377 = vadd.f32 %v145, %v369
    %v378 = vadd.f32 %v148, %v370
    %v379 = vxor.u32 %v375, 2147483648
    %v380 = vxor.u32 %v376, 2147483648
    %v381 = vxor.u32 %v377, 2147483648
    %v382 = vxor.u32 %v378, 2147483648
    %v383 = vmul.f32 %v379, 1.442695
    %v384 = vpow.pop %v383
    %v385 = vmul.f32 %v380, 1.442695
    %v386 = vpow.pop %v385
    %v387 = vmul.f32 %v381, 1.442695
    %v388 = vpow.pop %v387
    %v389 = vmul.f32 %v382, 1.442695
    %v390 = vpow.pop %v389
    %v391 = vadd.f32 %v384, 1.0
    %v392 = vadd.f32 %v386, 1.0
    %v393 = vadd.f32 %v388, 1.0
    %v394 = vadd.f32 %v390, 1.0
    %v395 = vrcp.pop %v391
    %v396 = vmul.f32 %v391, %v395
    %v397 = vsub.f32 1.0, %v396
    %v398 = vmul.f32 %v395, %v397
    %v399 = vadd.f32 %v395, %v398
    %vm400 = vweird.f32 %v391
    %vm401 = vweird.f32 %v395
    %vm402 = vmor %vm400, %vm401
    %v403 = vsel %vm402, %v395, %v399
    %v404 = vand.u32 2147483647, %v391
    %vm405 = vcmp.eq.f32.partialorder %v404, 8.507059e+37
    %v406 = vand.u32 %v391, 2147483648
    %v407 = vor.u32 1.1754944e-38, %v406
    %v408 = vsel %vm405, %v407, %v403
    %v409 = vmul.f32 1.0, %v408
    %v410 = vrcp.pop %v392
    %v411 = vmul.f32 %v392, %v410
    %v412 = vsub.f32 1.0, %v411
    %v413 = vmul.f32 %v410, %v412
    %v414 = vadd.f32 %v410, %v413
    %vm415 = vweird.f32 %v392
    %vm416 = vweird.f32 %v410
    %vm417 = vmor %vm415, %vm416
    %v418 = vsel %vm417, %v410, %v414
    %v419 = vand.u32 2147483647, %v392
    %vm420 = vcmp.eq.f32.partialorder %v419, 8.507059e+37
    %v421 = vand.u32 %v392, 2147483648
    %v422 = vor.u32 1.1754944e-38, %v421
    %v423 = vsel %vm420, %v422, %v418
    %v424 = vmul.f32 1.0, %v423
    %v425 = vrcp.pop %v393
    %v426 = vmul.f32 %v393, %v425
    %v427 = vsub.f32 1.0, %v426
    %v428 = vmul.f32 %v425, %v427
    %v429 = vadd.f32 %v425, %v428
    %vm430 = vweird.f32 %v393
    %vm431 = vweird.f32 %v425
    %vm432 = vmor %vm430, %vm431
    %v433 = vsel %vm432, %v425, %v429
    %v434 = vand.u32 2147483647, %v393
    %vm435 = vcmp.eq.f32.partialorder %v434, 8.507059e+37
    %v436 = vand.u32 %v393, 2147483648
    %v437 = vor.u32 1.1754944e-38, %v436
    %v438 = vsel %vm435, %v437, %v433
    %v439 = vmul.f32 1.0, %v438
    %v440 = vrcp.pop %v394
    %v441 = vmul.f32 %v394, %v440
    %v442 = vsub.f32 1.0, %v441
    %v443 = vmul.f32 %v440, %v442
    %v444 = vadd.f32 %v440, %v443
    %vm445 = vweird.f32 %v394
    %vm446 = vweird.f32 %v440
    %vm447 = vmor %vm445, %vm446
    %v448 = vsel %vm447, %v440, %v444
    %v449 = vand.u32 2147483647, %v394
    %vm450 = vcmp.eq.f32.partialorder %v449, 8.507059e+37
    %v451 = vand.u32 %v394, 2147483648
    %v452 = vor.u32 1.1754944e-38, %v451
    %v453 = vsel %vm450, %v452, %v448
    %v454 = vmul.f32 1.0, %v453
    %v456 = vrot.slane %v277, 1
    %v457 = vrot.slane %v277, 2
    %v458 = vrot.slane %v277, 3
    %v463 = vmul.f32 %v321, %v277
    %v464 = vmul.f32 %v336, %v456
    %v465 = vmul.f32 %v351, %v457
    %v466 = vmul.f32 %v366, %v458
    %v467 = vadd.f32 %v176, %v463
    %v468 = vadd.f32 %v179, %v464
    %v469 = vadd.f32 %v182, %v465
    %v470 = vadd.f32 %v185, %v466
    %v471 = vtanh.pop %v467
    %v472 = vtanh.pop %v468
    %v473 = vtanh.pop %v469
    %v474 = vtanh.pop %v470
    %v475 = vsub.f32 1.0, %v409
    %v476 = vsub.f32 1.0, %v424
    %v477 = vsub.f32 1.0, %v439
    %v478 = vsub.f32 1.0, %v454
    %v479 = vmul.f32 %v475, %v471
    %v480 = vmul.f32 %v476, %v472
    %v481 = vmul.f32 %v477, %v473
    %v482 = vmul.f32 %v478, %v474
    %v483 = vmul.f32 %v409, 0.0
    %v484 = vmul.f32 %v424, 0.0
    %v485 = vmul.f32 %v439, 0.0
    %v486 = vmul.f32 %v454, 0.0
    %v487 = vadd.f32 %v479, %v483
    %v488 = vadd.f32 %v480, %v484
    %v489 = vadd.f32 %v481, %v485
    %v490 = vadd.f32 %v482, %v486
    %v495 = vrot.slane %v488, 7
    %vm496 = vcmask 1041409
    %v497 = vsel %vm496, %v495, %v487
    %v498 = vrot.slane %v489, 6
    %vm499 = vcmask 1042434
    %v500 = vsel %vm499, %v498, %v497
    %v501 = vrot.slane %v490, 5
    %vm502 = vcmask 1043459
    %v503 = vsel %vm502, %v501, %v500
    %v504 = vsel %vm209, %v503, 0
    %506 = vmatpush.msra.mxu0 0.0
    %507 = vmatpush.msra.mxu0 0.0
    %508 = vmatpush.msra.mxu0 0.0
    %509 = vmatpush.msra.mxu0 0.0
    %510 = vmatpush.msra.mxu0 0.0
    %511 = vmatpush.msra.mxu0 0.0
    %512 = vmatpush.msra.mxu0 0.0
    %513 = vmatpush.msra.mxu0 0.0
    %514 = vmatpush.msra.mxu0 0.0
    %515 = vmatpush.msra.mxu0 0.0
    %516 = vmatpush.msra.mxu0 0.0
    %517 = vmatpush.msra.mxu0 0.0
    %518 = vmatpush.msra.mxu0 %v190
    %519 = vmatpush.msra.mxu0 %v189
    %520 = vmatpush.msra.mxu0 %v188
    %521 = vmatpush.msra.mxu0 %v187
    %522 = vmatmul.f32.gmra.mxu0 %v504
    %v523 = vpop.f32.mrf.mxu0
    %v524 = vadd.f32 %v207, %v523
    %525 = vdwg.mxu0
    %526 = vmatpush.msra.mxu0 0.0
    %527 = vmatpush.msra.mxu0 0.0
    %528 = vmatpush.msra.mxu0 0.0
    %529 = vmatpush.msra.mxu0 0.0
    %530 = vmatpush.msra.mxu0 0.0
    %531 = vmatpush.msra.mxu0 0.0
    %532 = vmatpush.msra.mxu0 0.0
    %533 = vmatpush.msra.mxu0 0.0
    %534 = vmatpush.msra.mxu0 0.0
    %535 = vmatpush.msra.mxu0 0.0
    %536 = vmatpush.msra.mxu0 0.0
    %537 = vmatpush.msra.mxu0 0.0
    %538 = vmatpush.msra.mxu0 %v195
    %539 = vmatpush.msra.mxu0 %v194
    %540 = vmatpush.msra.mxu0 %v193
    %541 = vmatpush.msra.mxu0 %v192
    %542 = vmatmul.f32.gmra.mxu0 %v504
    %v543 = vpop.f32.mrf.mxu0
    %v544 = vadd.f32 %v234, %v543
    %545 = vdwg.mxu0
    %546 = vmatpush.msra.mxu0 0.0
    %547 = vmatpush.msra.mxu0 0.0
    %548 = vmatpush.msra.mxu0 0.0
    %549 = vmatpush.msra.mxu0 0.0
    %550 = vmatpush.msra.mxu0 0.0
    %551 = vmatpush.msra.mxu0 0.0
    %552 = vmatpush.msra.mxu0 0.0
    %553 = vmatpush.msra.mxu0 0.0
    %554 = vmatpush.msra.mxu0 0.0
    %555 = vmatpush.msra.mxu0 0.0
    %556 = vmatpush.msra.mxu0 0.0
    %557 = vmatpush.msra.mxu0 0.0
    %558 = vmatpush.msra.mxu0 %v200
    %559 = vmatpush.msra.mxu0 %v199
    %560 = vmatpush.msra.mxu0 %v198
    %561 = vmatpush.msra.mxu0 %v197
    %562 = vmatmul.f32.gmra.mxu0 %v504
    %v563 = vpop.f32.mrf.mxu0
    %v564 = vadd.f32 %v257, %v563
    %565 = vdwg.mxu0
    %v567 = vrot.slane %v524, 7
    %v568 = vrot.slane %v524, 1
    %v569 = vrot.slane %v524, 2
    %v574 = vadd.f32 %v102, %v567
    %v575 = vadd.f32 %v105, %v524
    %v576 = vadd.f32 %v108, %v568
    %v577 = vadd.f32 %v111, %v569
    %v578 = vxor.u32 %v574, 2147483648
    %v579 = vxor.u32 %v575, 2147483648
    %v580 = vxor.u32 %v576, 2147483648
    %v581 = vxor.u32 %v577, 2147483648
    %v582 = vmul.f32 %v578, 1.442695
    %v583 = vpow.pop %v582
    %v584 = vmul.f32 %v579, 1.442695
    %v585 = vpow.pop %v584
    %v586 = vmul.f32 %v580, 1.442695
    %v587 = vpow.pop %v586
    %v588 = vmul.f32 %v581, 1.442695
    %v589 = vpow.pop %v588
    %v590 = vadd.f32 %v583, 1.0
    %v591 = vadd.f32 %v585, 1.0
    %v592 = vadd.f32 %v587, 1.0
    %v593 = vadd.f32 %v589, 1.0
    %v594 = vrcp.pop %v590
    %v595 = vmul.f32 %v590, %v594
    %v596 = vsub.f32 1.0, %v595
    %v597 = vmul.f32 %v594, %v596
    %v598 = vadd.f32 %v594, %v597
    %vm599 = vweird.f32 %v590
    %vm600 = vweird.f32 %v594
    %vm601 = vmor %vm599, %vm600
    %v602 = vsel %vm601, %v594, %v598
    %v603 = vand.u32 2147483647, %v590
    %vm604 = vcmp.eq.f32.partialorder %v603, 8.507059e+37
    %v605 = vand.u32 %v590, 2147483648
    %v606 = vor.u32 1.1754944e-38, %v605
    %v607 = vsel %vm604, %v606, %v602
    %v608 = vmul.f32 1.0, %v607
    %v609 = vrcp.pop %v591
    %v610 = vmul.f32 %v591, %v609
    %v611 = vsub.f32 1.0, %v610
    %v612 = vmul.f32 %v609, %v611
    %v613 = vadd.f32 %v609, %v612
    %vm614 = vweird.f32 %v591
    %vm615 = vweird.f32 %v609
    %vm616 = vmor %vm614, %vm615
    %v617 = vsel %vm616, %v609, %v613
    %v618 = vand.u32 2147483647, %v591
    %vm619 = vcmp.eq.f32.partialorder %v618, 8.507059e+37
    %v620 = vand.u32 %v591, 2147483648
    %v621 = vor.u32 1.1754944e-38, %v620
    %v622 = vsel %vm619, %v621, %v617
    %v623 = vmul.f32 1.0, %v622
    %v624 = vrcp.pop %v592
    %v625 = vmul.f32 %v592, %v624
    %v626 = vsub.f32 1.0, %v625
    %v627 = vmul.f32 %v624, %v626
    %v628 = vadd.f32 %v624, %v627
    %vm629 = vweird.f32 %v592
    %vm630 = vweird.f32 %v624
    %vm631 = vmor %vm629, %vm630
    %v632 = vsel %vm631, %v624, %v628
    %v633 = vand.u32 2147483647, %v592
    %vm634 = vcmp.eq.f32.partialorder %v633, 8.507059e+37
    %v635 = vand.u32 %v592, 2147483648
    %v636 = vor.u32 1.1754944e-38, %v635
    %v637 = vsel %vm634, %v636, %v632
    %v638 = vmul.f32 1.0, %v637
    %v639 = vrcp.pop %v593
    %v640 = vmul.f32 %v593, %v639
    %v641 = vsub.f32 1.0, %v640
    %v642 = vmul.f32 %v639, %v641
    %v643 = vadd.f32 %v639, %v642
    %vm644 = vweird.f32 %v593
    %vm645 = vweird.f32 %v639
    %vm646 = vmor %vm644, %vm645
    %v647 = vsel %vm646, %v639, %v643
    %v648 = vand.u32 2147483647, %v593
    %vm649 = vcmp.eq.f32.partialorder %v648, 8.507059e+37
    %v650 = vand.u32 %v593, 2147483648
    %v651 = vor.u32 1.1754944e-38, %v650
    %v652 = vsel %vm649, %v651, %v647
    %v653 = vmul.f32 1.0, %v652
    %v655 = vrot.slane %v544, 7
    %v656 = vrot.slane %v544, 1
    %v657 = vrot.slane %v544, 2
    %v662 = vadd.f32 %v139, %v655
    %v663 = vadd.f32 %v142, %v544
    %v664 = vadd.f32 %v145, %v656
    %v665 = vadd.f32 %v148, %v657
    %v666 = vxor.u32 %v662, 2147483648
    %v667 = vxor.u32 %v663, 2147483648
    %v668 = vxor.u32 %v664, 2147483648
    %v669 = vxor.u32 %v665, 2147483648
    %v670 = vmul.f32 %v666, 1.442695
    %v671 = vpow.pop %v670
    %v672 = vmul.f32 %v667, 1.442695
    %v673 = vpow.pop %v672
    %v674 = vmul.f32 %v668, 1.442695
    %v675 = vpow.pop %v674
    %v676 = vmul.f32 %v669, 1.442695
    %v677 = vpow.pop %v676
    %v678 = vadd.f32 %v671, 1.0
    %v679 = vadd.f32 %v673, 1.0
    %v680 = vadd.f32 %v675, 1.0
    %v681 = vadd.f32 %v677, 1.0
    %v682 = vrcp.pop %v678
    %v683 = vmul.f32 %v678, %v682
    %v684 = vsub.f32 1.0, %v683
    %v685 = vmul.f32 %v682, %v684
    %v686 = vadd.f32 %v682, %v685
    %vm687 = vweird.f32 %v678
    %vm688 = vweird.f32 %v682
    %vm689 = vmor %vm687, %vm688
    %v690 = vsel %vm689, %v682, %v686
    %v691 = vand.u32 2147483647, %v678
    %vm692 = vcmp.eq.f32.partialorder %v691, 8.507059e+37
    %v693 = vand.u32 %v678, 2147483648
    %v694 = vor.u32 1.1754944e-38, %v693
    %v695 = vsel %vm692, %v694, %v690
    %v696 = vmul.f32 1.0, %v695
    %v697 = vrcp.pop %v679
    %v698 = vmul.f32 %v679, %v697
    %v699 = vsub.f32 1.0, %v698
    %v700 = vmul.f32 %v697, %v699
    %v701 = vadd.f32 %v697, %v700
    %vm702 = vweird.f32 %v679
    %vm703 = vweird.f32 %v697
    %vm704 = vmor %vm702, %vm703
    %v705 = vsel %vm704, %v697, %v701
    %v706 = vand.u32 2147483647, %v679
    %vm707 = vcmp.eq.f32.partialorder %v706, 8.507059e+37
    %v708 = vand.u32 %v679, 2147483648
    %v709 = vor.u32 1.1754944e-38, %v708
    %v710 = vsel %vm707, %v709, %v705
    %v711 = vmul.f32 1.0, %v710
    %v712 = vrcp.pop %v680
    %v713 = vmul.f32 %v680, %v712
    %v714 = vsub.f32 1.0, %v713
    %v715 = vmul.f32 %v712, %v714
    %v716 = vadd.f32 %v712, %v715
    %vm717 = vweird.f32 %v680
    %vm718 = vweird.f32 %v712
    %vm719 = vmor %vm717, %vm718
    %v720 = vsel %vm719, %v712, %v716
    %v721 = vand.u32 2147483647, %v680
    %vm722 = vcmp.eq.f32.partialorder %v721, 8.507059e+37
    %v723 = vand.u32 %v680, 2147483648
    %v724 = vor.u32 1.1754944e-38, %v723
    %v725 = vsel %vm722, %v724, %v720
    %v726 = vmul.f32 1.0, %v725
    %v727 = vrcp.pop %v681
    %v728 = vmul.f32 %v681, %v727
    %v729 = vsub.f32 1.0, %v728
    %v730 = vmul.f32 %v727, %v729
    %v731 = vadd.f32 %v727, %v730
    %vm732 = vweird.f32 %v681
    %vm733 = vweird.f32 %v727
    %vm734 = vmor %vm732, %vm733
    %v735 = vsel %vm734, %v727, %v731
    %v736 = vand.u32 2147483647, %v681
    %vm737 = vcmp.eq.f32.partialorder %v736, 8.507059e+37
    %v738 = vand.u32 %v681, 2147483648
    %v739 = vor.u32 1.1754944e-38, %v738
    %v740 = vsel %vm737, %v739, %v735
    %v741 = vmul.f32 1.0, %v740
    %v743 = vrot.slane %v564, 7
    %v744 = vrot.slane %v564, 1
    %v745 = vrot.slane %v564, 2
    %v750 = vmul.f32 %v608, %v743
    %v751 = vmul.f32 %v623, %v564
    %v752 = vmul.f32 %v638, %v744
    %v753 = vmul.f32 %v653, %v745
    %v754 = vadd.f32 %v176, %v750
    %v755 = vadd.f32 %v179, %v751
    %v756 = vadd.f32 %v182, %v752
    %v757 = vadd.f32 %v185, %v753
    %v758 = vtanh.pop %v754
    %v759 = vtanh.pop %v755
    %v760 = vtanh.pop %v756
    %v761 = vtanh.pop %v757
    %v762 = vsub.f32 1.0, %v696
    %v763 = vsub.f32 1.0, %v711
    %v764 = vsub.f32 1.0, %v726
    %v765 = vsub.f32 1.0, %v741
    %v766 = vmul.f32 %v762, %v758
    %v767 = vmul.f32 %v763, %v759
    %v768 = vmul.f32 %v764, %v760
    %v769 = vmul.f32 %v765, %v761
    %v770 = vrot.slane %v487, 7
    %v771 = vrot.slane %v489, 7
    %v772 = vrot.slane %v490, 7
    %v777 = vmul.f32 %v696, %v770
    %v778 = vmul.f32 %v711, %v495
    %v779 = vmul.f32 %v726, %v771
    %v780 = vmul.f32 %v741, %v772
    %v781 = vadd.f32 %v766, %v777
    %v782 = vadd.f32 %v767, %v778
    %v783 = vadd.f32 %v768, %v779
    %v784 = vadd.f32 %v769, %v780
    %v789 = vrot.slane %v781, 1
    %v790 = vsel %vm496, %v782, %v789
    %v791 = vrot.slane %v783, 7
    %v792 = vsel %vm499, %v791, %v790
    %v793 = vrot.slane %v784, 6
    %v794 = vsel %vm502, %v793, %v792
    %v795 = vsel %vm209, %v794, 0
    %797 = vmatpush.msra.mxu0 0.0
    %798 = vmatpush.msra.mxu0 0.0
    %799 = vmatpush.msra.mxu0 0.0
    %800 = vmatpush.msra.mxu0 0.0
    %801 = vmatpush.msra.mxu0 0.0
    %802 = vmatpush.msra.mxu0 0.0
    %803 = vmatpush.msra.mxu0 0.0
    %804 = vmatpush.msra.mxu0 0.0
    %805 = vmatpush.msra.mxu0 0.0
    %806 = vmatpush.msra.mxu0 0.0
    %807 = vmatpush.msra.mxu0 0.0
    %808 = vmatpush.msra.mxu0 0.0
    %809 = vmatpush.msra.mxu0 %v190
    %810 = vmatpush.msra.mxu0 %v189
    %811 = vmatpush.msra.mxu0 %v188
    %812 = vmatpush.msra.mxu0 %v187
    %813 = vmatmul.f32.gmra.mxu0 %v795
    %v814 = vpop.f32.mrf.mxu0
    %v815 = vadd.f32 %v207, %v814
    %816 = vdwg.mxu0
    %817 = vmatpush.msra.mxu0 0.0
    %818 = vmatpush.msra.mxu0 0.0
    %819 = vmatpush.msra.mxu0 0.0
    %820 = vmatpush.msra.mxu0 0.0
    %821 = vmatpush.msra.mxu0 0.0
    %822 = vmatpush.msra.mxu0 0.0
    %823 = vmatpush.msra.mxu0 0.0
    %824 = vmatpush.msra.mxu0 0.0
    %825 = vmatpush.msra.mxu0 0.0
    %826 = vmatpush.msra.mxu0 0.0
    %827 = vmatpush.msra.mxu0 0.0
    %828 = vmatpush.msra.mxu0 0.0
    %829 = vmatpush.msra.mxu0 %v195
    %830 = vmatpush.msra.mxu0 %v194
    %831 = vmatpush.msra.mxu0 %v193
    %832 = vmatpush.msra.mxu0 %v192
    %833 = vmatmul.f32.gmra.mxu0 %v795
    %v834 = vpop.f32.mrf.mxu0
    %v835 = vadd.f32 %v234, %v834
    %836 = vdwg.mxu0
    %837 = vmatpush.msra.mxu0 0.0
    %838 = vmatpush.msra.mxu0 0.0
    %839 = vmatpush.msra.mxu0 0.0
    %840 = vmatpush.msra.mxu0 0.0
    %841 = vmatpush.msra.mxu0 0.0
    %842 = vmatpush.msra.mxu0 0.0
    %843 = vmatpush.msra.mxu0 0.0
    %844 = vmatpush.msra.mxu0 0.0
    %845 = vmatpush.msra.mxu0 0.0
    %846 = vmatpush.msra.mxu0 0.0
    %847 = vmatpush.msra.mxu0 0.0
    %848 = vmatpush.msra.mxu0 0.0
    %849 = vmatpush.msra.mxu0 %v200
    %850 = vmatpush.msra.mxu0 %v199
    %851 = vmatpush.msra.mxu0 %v198
    %852 = vmatpush.msra.mxu0 %v197
    %853 = vmatmul.f32.gmra.mxu0 %v795
    %v854 = vpop.f32.mrf.mxu0
    %v855 = vadd.f32 %v257, %v854
    %856 = vdwg.mxu0
    %v858 = vrot.slane %v815, 6
    %v859 = vrot.slane %v815, 7
    %v860 = vrot.slane %v815, 1
    %v865 = vadd.f32 %v102, %v858
    %v866 = vadd.f32 %v105, %v859
    %v867 = vadd.f32 %v108, %v815
    %v868 = vadd.f32 %v111, %v860
    %v869 = vxor.u32 %v865, 2147483648
    %v870 = vxor.u32 %v866, 2147483648
    %v871 = vxor.u32 %v867, 2147483648
    %v872 = vxor.u32 %v868, 2147483648
    %v873 = vmul.f32 %v869, 1.442695
    %v874 = vpow.pop %v873
    %v875 = vmul.f32 %v870, 1.442695
    %v876 = vpow.pop %v875
    %v877 = vmul.f32 %v871, 1.442695
    %v878 = vpow.pop %v877
    %v879 = vmul.f32 %v872, 1.442695
    %v880 = vpow.pop %v879
    %v881 = vadd.f32 %v874, 1.0
    %v882 = vadd.f32 %v876, 1.0
    %v883 = vadd.f32 %v878, 1.0
    %v884 = vadd.f32 %v880, 1.0
    %v885 = vrcp.pop %v881
    %v886 = vmul.f32 %v881, %v885
    %v887 = vsub.f32 1.0, %v886
    %v888 = vmul.f32 %v885, %v887
    %v889 = vadd.f32 %v885, %v888
    %vm890 = vweird.f32 %v881
    %vm891 = vweird.f32 %v885
    %vm892 = vmor %vm890, %vm891
    %v893 = vsel %vm892, %v885, %v889
    %v894 = vand.u32 2147483647, %v881
    %vm895 = vcmp.eq.f32.partialorder %v894, 8.507059e+37
    %v896 = vand.u32 %v881, 2147483648
    %v897 = vor.u32 1.1754944e-38, %v896
    %v898 = vsel %vm895, %v897, %v893
    %v899 = vmul.f32 1.0, %v898
    %v900 = vrcp.pop %v882
    %v901 = vmul.f32 %v882, %v900
    %v902 = vsub.f32 1.0, %v901
    %v903 = vmul.f32 %v900, %v902
    %v904 = vadd.f32 %v900, %v903
    %vm905 = vweird.f32 %v882
    %vm906 = vweird.f32 %v900
    %vm907 = vmor %vm905, %vm906
    %v908 = vsel %vm907, %v900, %v904
    %v909 = vand.u32 2147483647, %v882
    %vm910 = vcmp.eq.f32.partialorder %v909, 8.507059e+37
    %v911 = vand.u32 %v882, 2147483648
    %v912 = vor.u32 1.1754944e-38, %v911
    %v913 = vsel %vm910, %v912, %v908
    %v914 = vmul.f32 1.0, %v913
    %v915 = vrcp.pop %v883
    %v916 = vmul.f32 %v883, %v915
    %v917 = vsub.f32 1.0, %v916
    %v918 = vmul.f32 %v915, %v917
    %v919 = vadd.f32 %v915, %v918
    %vm920 = vweird.f32 %v883
    %vm921 = vweird.f32 %v915
    %vm922 = vmor %vm920, %vm921
    %v923 = vsel %vm922, %v915, %v919
    %v924 = vand.u32 2147483647, %v883
    %vm925 = vcmp.eq.f32.partialorder %v924, 8.507059e+37
    %v926 = vand.u32 %v883, 2147483648
    %v927 = vor.u32 1.1754944e-38, %v926
    %v928 = vsel %vm925, %v927, %v923
    %v929 = vmul.f32 1.0, %v928
    %v930 = vrcp.pop %v884
    %v931 = vmul.f32 %v884, %v930
    %v932 = vsub.f32 1.0, %v931
    %v933 = vmul.f32 %v930, %v932
    %v934 = vadd.f32 %v930, %v933
    %vm935 = vweird.f32 %v884
    %vm936 = vweird.f32 %v930
    %vm937 = vmor %vm935, %vm936
    %v938 = vsel %vm937, %v930, %v934
    %v939 = vand.u32 2147483647, %v884
    %vm940 = vcmp.eq.f32.partialorder %v939, 8.507059e+37
    %v941 = vand.u32 %v884, 2147483648
    %v942 = vor.u32 1.1754944e-38, %v941
    %v943 = vsel %vm940, %v942, %v938
    %v944 = vmul.f32 1.0, %v943
    %v946 = vrot.slane %v835, 6
    %v947 = vrot.slane %v835, 7
    %v948 = vrot.slane %v835, 1
    %v953 = vadd.f32 %v139, %v946
    %v954 = vadd.f32 %v142, %v947
    %v955 = vadd.f32 %v145, %v835
    %v956 = vadd.f32 %v148, %v948
    %v957 = vxor.u32 %v953, 2147483648
    %v958 = vxor.u32 %v954, 2147483648
    %v959 = vxor.u32 %v955, 2147483648
    %v960 = vxor.u32 %v956, 2147483648
    %v961 = vmul.f32 %v957, 1.442695
    %v962 = vpow.pop %v961
    %v963 = vmul.f32 %v958, 1.442695
    %v964 = vpow.pop %v963
    %v965 = vmul.f32 %v959, 1.442695
    %v966 = vpow.pop %v965
    %v967 = vmul.f32 %v960, 1.442695
    %v968 = vpow.pop %v967
    %v969 = vadd.f32 %v962, 1.0
    %v970 = vadd.f32 %v964, 1.0
    %v971 = vadd.f32 %v966, 1.0
    %v972 = vadd.f32 %v968, 1.0
    %v973 = vrcp.pop %v969
    %v974 = vmul.f32 %v969, %v973
    %v975 = vsub.f32 1.0, %v974
    %v976 = vmul.f32 %v973, %v975
    %v977 = vadd.f32 %v973, %v976
    %vm978 = vweird.f32 %v969
    %vm979 = vweird.f32 %v973
    %vm980 = vmor %vm978, %vm979
    %v981 = vsel %vm980, %v973, %v977
    %v982 = vand.u32 2147483647, %v969
    %vm983 = vcmp.eq.f32.partialorder %v982, 8.507059e+37
    %v984 = vand.u32 %v969, 2147483648
    %v985 = vor.u32 1.1754944e-38, %v984
    %v986 = vsel %vm983, %v985, %v981
    %v987 = vmul.f32 1.0, %v986
    %v988 = vrcp.pop %v970
    %v989 = vmul.f32 %v970, %v988
    %v990 = vsub.f32 1.0, %v989
    %v991 = vmul.f32 %v988, %v990
    %v992 = vadd.f32 %v988, %v991
    %vm993 = vweird.f32 %v970
    %vm994 = vweird.f32 %v988
    %vm995 = vmor %vm993, %vm994
    %v996 = vsel %vm995, %v988, %v992
    %v997 = vand.u32 2147483647, %v970
    %vm998 = vcmp.eq.f32.partialorder %v997, 8.507059e+37
    %v999 = vand.u32 %v970, 2147483648
    %v1000 = vor.u32 1.1754944e-38, %v999
    %v1001 = vsel %vm998, %v1000, %v996
    %v1002 = vmul.f32 1.0, %v1001
    %v1003 = vrcp.pop %v971
    %v1004 = vmul.f32 %v971, %v1003
    %v1005 = vsub.f32 1.0, %v1004
    %v1006 = vmul.f32 %v1003, %v1005
    %v1007 = vadd.f32 %v1003, %v1006
    %vm1008 = vweird.f32 %v971
    %vm1009 = vweird.f32 %v1003
    %vm1010 = vmor %vm1008, %vm1009
    %v1011 = vsel %vm1010, %v1003, %v1007
    %v1012 = vand.u32 2147483647, %v971
    %vm1013 = vcmp.eq.f32.partialorder %v1012, 8.507059e+37
    %v1014 = vand.u32 %v971, 2147483648
    %v1015 = vor.u32 1.1754944e-38, %v1014
    %v1016 = vsel %vm1013, %v1015, %v1011
    %v1017 = vmul.f32 1.0, %v1016
    %v1018 = vrcp.pop %v972
    %v1019 = vmul.f32 %v972, %v1018
    %v1020 = vsub.f32 1.0, %v1019
    %v1021 = vmul.f32 %v1018, %v1020
    %v1022 = vadd.f32 %v1018, %v1021
    %vm1023 = vweird.f32 %v972
    %vm1024 = vweird.f32 %v1018
    %vm1025 = vmor %vm1023, %vm1024
    %v1026 = vsel %vm1025, %v1018, %v1022
    %v1027 = vand.u32 2147483647, %v972
    %vm1028 = vcmp.eq.f32.partialorder %v1027, 8.507059e+37
    %v1029 = vand.u32 %v972, 2147483648
    %v1030 = vor.u32 1.1754944e-38, %v1029
    %v1031 = vsel %vm1028, %v1030, %v1026
    %v1032 = vmul.f32 1.0, %v1031
    %v1034 = vrot.slane %v855, 6
    %v1035 = vrot.slane %v855, 7
    %v1036 = vrot.slane %v855, 1
    %v1041 = vmul.f32 %v899, %v1034
    %v1042 = vmul.f32 %v914, %v1035
    %v1043 = vmul.f32 %v929, %v855
    %v1044 = vmul.f32 %v944, %v1036
    %v1045 = vadd.f32 %v176, %v1041
    %v1046 = vadd.f32 %v179, %v1042
    %v1047 = vadd.f32 %v182, %v1043
    %v1048 = vadd.f32 %v185, %v1044
    %v1049 = vtanh.pop %v1045
    %v1050 = vtanh.pop %v1046
    %v1051 = vtanh.pop %v1047
    %v1052 = vtanh.pop %v1048
    %v1053 = vsub.f32 1.0, %v987
    %v1054 = vsub.f32 1.0, %v1002
    %v1055 = vsub.f32 1.0, %v1017
    %v1056 = vsub.f32 1.0, %v1032
    %v1057 = vmul.f32 %v1053, %v1049
    %v1058 = vmul.f32 %v1054, %v1050
    %v1059 = vmul.f32 %v1055, %v1051
    %v1060 = vmul.f32 %v1056, %v1052
    %v1061 = vrot.slane %v781, 7
    %v1062 = vrot.slane %v782, 7
    %v1063 = vrot.slane %v784, 7
    %v1068 = vmul.f32 %v987, %v1061
    %v1069 = vmul.f32 %v1002, %v1062
    %v1070 = vmul.f32 %v1017, %v791
    %v1071 = vmul.f32 %v1032, %v1063
    %v1072 = vadd.f32 %v1057, %v1068
    %v1073 = vadd.f32 %v1058, %v1069
    %v1074 = vadd.f32 %v1059, %v1070
    %v1075 = vadd.f32 %v1060, %v1071
    %v1080 = vrot.slane %v1072, 2
    %v1081 = vrot.slane %v1073, 1
    %v1082 = vsel %vm496, %v1081, %v1080
    %v1083 = vsel %vm499, %v1074, %v1082
    %v1084 = vrot.slane %v1075, 7
    %v1085 = vsel %vm502, %v1084, %v1083
    %v1086 = vsel %vm209, %v1085, 0
    %1088 = vmatpush.msra.mxu0 0.0
    %1089 = vmatpush.msra.mxu0 0.0
    %1090 = vmatpush.msra.mxu0 0.0
    %1091 = vmatpush.msra.mxu0 0.0
    %1092 = vmatpush.msra.mxu0 0.0
    %1093 = vmatpush.msra.mxu0 0.0
    %1094 = vmatpush.msra.mxu0 0.0
    %1095 = vmatpush.msra.mxu0 0.0
    %1096 = vmatpush.msra.mxu0 0.0
    %1097 = vmatpush.msra.mxu0 0.0
    %1098 = vmatpush.msra.mxu0 0.0
    %1099 = vmatpush.msra.mxu0 0.0
    %1100 = vmatpush.msra.mxu0 %v190
    %1101 = vmatpush.msra.mxu0 %v189
    %1102 = vmatpush.msra.mxu0 %v188
    %1103 = vmatpush.msra.mxu0 %v187
    %1104 = vmatmul.f32.gmra.mxu0 %v1086
    %v1105 = vpop.f32.mrf.mxu0
    %v1106 = vadd.f32 %v207, %v1105
    %1107 = vdwg.mxu0
    %1108 = vmatpush.msra.mxu0 0.0
    %1109 = vmatpush.msra.mxu0 0.0
    %1110 = vmatpush.msra.mxu0 0.0
    %1111 = vmatpush.msra.mxu0 0.0
    %1112 = vmatpush.msra.mxu0 0.0
    %1113 = vmatpush.msra.mxu0 0.0
    %1114 = vmatpush.msra.mxu0 0.0
    %1115 = vmatpush.msra.mxu0 0.0
    %1116 = vmatpush.msra.mxu0 0.0
    %1117 = vmatpush.msra.mxu0 0.0
    %1118 = vmatpush.msra.mxu0 0.0
    %1119 = vmatpush.msra.mxu0 0.0
    %1120 = vmatpush.msra.mxu0 %v195
    %1121 = vmatpush.msra.mxu0 %v194
    %1122 = vmatpush.msra.mxu0 %v193
    %1123 = vmatpush.msra.mxu0 %v192
    %1124 = vmatmul.f32.gmra.mxu0 %v1086
    %v1125 = vpop.f32.mrf.mxu0
    %v1126 = vadd.f32 %v234, %v1125
    %1127 = vdwg.mxu0
    %1128 = vmatpush.msra.mxu0 0.0
    %1129 = vmatpush.msra.mxu0 0.0
    %1130 = vmatpush.msra.mxu0 0.0
    %1131 = vmatpush.msra.mxu0 0.0
    %1132 = vmatpush.msra.mxu0 0.0
    %1133 = vmatpush.msra.mxu0 0.0
    %1134 = vmatpush.msra.mxu0 0.0
    %1135 = vmatpush.msra.mxu0 0.0
    %1136 = vmatpush.msra.mxu0 0.0
    %1137 = vmatpush.msra.mxu0 0.0
    %1138 = vmatpush.msra.mxu0 0.0
    %1139 = vmatpush.msra.mxu0 0.0
    %1140 = vmatpush.msra.mxu0 %v200
    %1141 = vmatpush.msra.mxu0 %v199
    %1142 = vmatpush.msra.mxu0 %v198
    %1143 = vmatpush.msra.mxu0 %v197
    %1144 = vmatmul.f32.gmra.mxu0 %v1086
    %v1145 = vpop.f32.mrf.mxu0
    %v1146 = vadd.f32 %v257, %v1145
    %1147 = vdwg.mxu0
    %v1149 = vrot.slane %v1106, 5
    %v1150 = vrot.slane %v1106, 6
    %v1151 = vrot.slane %v1106, 7
    %v1156 = vadd.f32 %v102, %v1149
    %v1157 = vadd.f32 %v105, %v1150
    %v1158 = vadd.f32 %v108, %v1151
    %v1159 = vadd.f32 %v111, %v1106
    %v1160 = vxor.u32 %v1156, 2147483648
    %v1161 = vxor.u32 %v1157, 2147483648
    %v1162 = vxor.u32 %v1158, 2147483648
    %v1163 = vxor.u32 %v1159, 2147483648
    %v1164 = vmul.f32 %v1160, 1.442695
    %v1165 = vpow.pop %v1164
    %v1166 = vmul.f32 %v1161, 1.442695
    %v1167 = vpow.pop %v1166
    %v1168 = vmul.f32 %v1162, 1.442695
    %v1169 = vpow.pop %v1168
    %v1170 = vmul.f32 %v1163, 1.442695
    %v1171 = vpow.pop %v1170
    %v1172 = vadd.f32 %v1165, 1.0
    %v1173 = vadd.f32 %v1167, 1.0
    %v1174 = vadd.f32 %v1169, 1.0
    %v1175 = vadd.f32 %v1171, 1.0
    %v1176 = vrcp.pop %v1172
    %v1177 = vmul.f32 %v1172, %v1176
    %v1178 = vsub.f32 1.0, %v1177
    %v1179 = vmul.f32 %v1176, %v1178
    %v1180 = vadd.f32 %v1176, %v1179
    %vm1181 = vweird.f32 %v1172
    %vm1182 = vweird.f32 %v1176
    %vm1183 = vmor %vm1181, %vm1182
    %v1184 = vsel %vm1183, %v1176, %v1180
    %v1185 = vand.u32 2147483647, %v1172
    %vm1186 = vcmp.eq.f32.partialorder %v1185, 8.507059e+37
    %v1187 = vand.u32 %v1172, 2147483648
    %v1188 = vor.u32 1.1754944e-38, %v1187
    %v1189 = vsel %vm1186, %v1188, %v1184
    %v1190 = vmul.f32 1.0, %v1189
    %v1191 = vrcp.pop %v1173
    %v1192 = vmul.f32 %v1173, %v1191
    %v1193 = vsub.f32 1.0, %v1192
    %v1194 = vmul.f32 %v1191, %v1193
    %v1195 = vadd.f32 %v1191, %v1194
    %vm1196 = vweird.f32 %v1173
    %vm1197 = vweird.f32 %v1191
    %vm1198 = vmor %vm1196, %vm1197
    %v1199 = vsel %vm1198, %v1191, %v1195
    %v1200 = vand.u32 2147483647, %v1173
    %vm1201 = vcmp.eq.f32.partialorder %v1200, 8.507059e+37
    %v1202 = vand.u32 %v1173, 2147483648
    %v1203 = vor.u32 1.1754944e-38, %v1202
    %v1204 = vsel %vm1201, %v1203, %v1199
    %v1205 = vmul.f32 1.0, %v1204
    %v1206 = vrcp.pop %v1174
    %v1207 = vmul.f32 %v1174, %v1206
    %v1208 = vsub.f32 1.0, %v1207
    %v1209 = vmul.f32 %v1206, %v1208
    %v1210 = vadd.f32 %v1206, %v1209
    %vm1211 = vweird.f32 %v1174
    %vm1212 = vweird.f32 %v1206
    %vm1213 = vmor %vm1211, %vm1212
    %v1214 = vsel %vm1213, %v1206, %v1210
    %v1215 = vand.u32 2147483647, %v1174
    %vm1216 = vcmp.eq.f32.partialorder %v1215, 8.507059e+37
    %v1217 = vand.u32 %v1174, 2147483648
    %v1218 = vor.u32 1.1754944e-38, %v1217
    %v1219 = vsel %vm1216, %v1218, %v1214
    %v1220 = vmul.f32 1.0, %v1219
    %v1221 = vrcp.pop %v1175
    %v1222 = vmul.f32 %v1175, %v1221
    %v1223 = vsub.f32 1.0, %v1222
    %v1224 = vmul.f32 %v1221, %v1223
    %v1225 = vadd.f32 %v1221, %v1224
    %vm1226 = vweird.f32 %v1175
    %vm1227 = vweird.f32 %v1221
    %vm1228 = vmor %vm1226, %vm1227
    %v1229 = vsel %vm1228, %v1221, %v1225
    %v1230 = vand.u32 2147483647, %v1175
    %vm1231 = vcmp.eq.f32.partialorder %v1230, 8.507059e+37
    %v1232 = vand.u32 %v1175, 2147483648
    %v1233 = vor.u32 1.1754944e-38, %v1232
    %v1234 = vsel %vm1231, %v1233, %v1229
    %v1235 = vmul.f32 1.0, %v1234
    %v1237 = vrot.slane %v1126, 5
    %v1238 = vrot.slane %v1126, 6
    %v1239 = vrot.slane %v1126, 7
    %v1244 = vadd.f32 %v139, %v1237
    %v1245 = vadd.f32 %v142, %v1238
    %v1246 = vadd.f32 %v145, %v1239
    %v1247 = vadd.f32 %v148, %v1126
    %v1248 = vxor.u32 %v1244, 2147483648
    %v1249 = vxor.u32 %v1245, 2147483648
    %v1250 = vxor.u32 %v1246, 2147483648
    %v1251 = vxor.u32 %v1247, 2147483648
    %v1252 = vmul.f32 %v1248, 1.442695
    %v1253 = vpow.pop %v1252
    %v1254 = vmul.f32 %v1249, 1.442695
    %v1255 = vpow.pop %v1254
    %v1256 = vmul.f32 %v1250, 1.442695
    %v1257 = vpow.pop %v1256
    %v1258 = vmul.f32 %v1251, 1.442695
    %v1259 = vpow.pop %v1258
    %v1260 = vadd.f32 %v1253, 1.0
    %v1261 = vadd.f32 %v1255, 1.0
    %v1262 = vadd.f32 %v1257, 1.0
    %v1263 = vadd.f32 %v1259, 1.0
    %v1264 = vrcp.pop %v1260
    %v1265 = vmul.f32 %v1260, %v1264
    %v1266 = vsub.f32 1.0, %v1265
    %v1267 = vmul.f32 %v1264, %v1266
    %v1268 = vadd.f32 %v1264, %v1267
    %vm1269 = vweird.f32 %v1260
    %vm1270 = vweird.f32 %v1264
    %vm1271 = vmor %vm1269, %vm1270
    %v1272 = vsel %vm1271, %v1264, %v1268
    %v1273 = vand.u32 2147483647, %v1260
    %vm1274 = vcmp.eq.f32.partialorder %v1273, 8.507059e+37
    %v1275 = vand.u32 %v1260, 2147483648
    %v1276 = vor.u32 1.1754944e-38, %v1275
    %v1277 = vsel %vm1274, %v1276, %v1272
    %v1278 = vmul.f32 1.0, %v1277
    %v1279 = vrcp.pop %v1261
    %v1280 = vmul.f32 %v1261, %v1279
    %v1281 = vsub.f32 1.0, %v1280
    %v1282 = vmul.f32 %v1279, %v1281
    %v1283 = vadd.f32 %v1279, %v1282
    %vm1284 = vweird.f32 %v1261
    %vm1285 = vweird.f32 %v1279
    %vm1286 = vmor %vm1284, %vm1285
    %v1287 = vsel %vm1286, %v1279, %v1283
    %v1288 = vand.u32 2147483647, %v1261
    %vm1289 = vcmp.eq.f32.partialorder %v1288, 8.507059e+37
    %v1290 = vand.u32 %v1261, 2147483648
    %v1291 = vor.u32 1.1754944e-38, %v1290
    %v1292 = vsel %vm1289, %v1291, %v1287
    %v1293 = vmul.f32 1.0, %v1292
    %v1294 = vrcp.pop %v1262
    %v1295 = vmul.f32 %v1262, %v1294
    %v1296 = vsub.f32 1.0, %v1295
    %v1297 = vmul.f32 %v1294, %v1296
    %v1298 = vadd.f32 %v1294, %v1297
    %vm1299 = vweird.f32 %v1262
    %vm1300 = vweird.f32 %v1294
    %vm1301 = vmor %vm1299, %vm1300
    %v1302 = vsel %vm1301, %v1294, %v1298
    %v1303 = vand.u32 2147483647, %v1262
    %vm1304 = vcmp.eq.f32.partialorder %v1303, 8.507059e+37
    %v1305 = vand.u32 %v1262, 2147483648
    %v1306 = vor.u32 1.1754944e-38, %v1305
    %v1307 = vsel %vm1304, %v1306, %v1302
    %v1308 = vmul.f32 1.0, %v1307
    %v1309 = vrcp.pop %v1263
    %v1310 = vmul.f32 %v1263, %v1309
    %v1311 = vsub.f32 1.0, %v1310
    %v1312 = vmul.f32 %v1309, %v1311
    %v1313 = vadd.f32 %v1309, %v1312
    %vm1314 = vweird.f32 %v1263
    %vm1315 = vweird.f32 %v1309
    %vm1316 = vmor %vm1314, %vm1315
    %v1317 = vsel %vm1316, %v1309, %v1313
    %v1318 = vand.u32 2147483647, %v1263
    %vm1319 = vcmp.eq.f32.partialorder %v1318, 8.507059e+37
    %v1320 = vand.u32 %v1263, 2147483648
    %v1321 = vor.u32 1.1754944e-38, %v1320
    %v1322 = vsel %vm1319, %v1321, %v1317
    %v1323 = vmul.f32 1.0, %v1322
    %v1325 = vrot.slane %v1146, 5
    %v1326 = vrot.slane %v1146, 6
    %v1327 = vrot.slane %v1146, 7
    %v1332 = vmul.f32 %v1190, %v1325
    %v1333 = vmul.f32 %v1205, %v1326
    %v1334 = vmul.f32 %v1220, %v1327
    %v1335 = vmul.f32 %v1235, %v1146
    %v1336 = vadd.f32 %v176, %v1332
    %v1337 = vadd.f32 %v179, %v1333
    %v1338 = vadd.f32 %v182, %v1334
    %v1339 = vadd.f32 %v185, %v1335
    %v1340 = vtanh.pop %v1336
    %v1341 = vtanh.pop %v1337
    %v1342 = vtanh.pop %v1338
    %v1343 = vtanh.pop %v1339
    %v1344 = vsub.f32 1.0, %v1278
    %v1345 = vsub.f32 1.0, %v1293
    %v1346 = vsub.f32 1.0, %v1308
    %v1347 = vsub.f32 1.0, %v1323
    %v1348 = vmul.f32 %v1344, %v1340
    %v1349 = vmul.f32 %v1345, %v1341
    %v1350 = vmul.f32 %v1346, %v1342
    %v1351 = vmul.f32 %v1347, %v1343
    %v1352 = vrot.slane %v1072, 7
    %v1353 = vrot.slane %v1073, 7
    %v1354 = vrot.slane %v1074, 7
    %v1359 = vmul.f32 %v1278, %v1352
    %v1360 = vmul.f32 %v1293, %v1353
    %v1361 = vmul.f32 %v1308, %v1354
    %v1362 = vmul.f32 %v1323, %v1084
    %v1363 = vadd.f32 %v1348, %v1359
    %v1364 = vadd.f32 %v1349, %v1360
    %v1365 = vadd.f32 %v1350, %v1361
    %v1366 = vadd.f32 %v1351, %v1362
    %v1371 = vrot.slane %v1363, 3
    %v1372 = vrot.slane %v1364, 2
    %v1373 = vsel %vm496, %v1372, %v1371
    %v1374 = vrot.slane %v1365, 1
    %v1375 = vsel %vm499, %v1374, %v1373
    %v1376 = vsel %vm502, %v1366, %v1375
    %v1377 = vsel %vm209, %v1376, 0
    %1379 = vmatpush.msra.mxu0 0.0
    %1380 = vmatpush.msra.mxu0 0.0
    %1381 = vmatpush.msra.mxu0 0.0
    %1382 = vmatpush.msra.mxu0 0.0
    %1383 = vmatpush.msra.mxu0 0.0
    %1384 = vmatpush.msra.mxu0 0.0
    %1385 = vmatpush.msra.mxu0 0.0
    %1386 = vmatpush.msra.mxu0 0.0
    %1387 = vmatpush.msra.mxu0 0.0
    %1388 = vmatpush.msra.mxu0 0.0
    %1389 = vmatpush.msra.mxu0 0.0
    %1390 = vmatpush.msra.mxu0 0.0
    %1391 = vmatpush.msra.mxu0 %v190
    %1392 = vmatpush.msra.mxu0 %v189
    %1393 = vmatpush.msra.mxu0 %v188
    %1394 = vmatpush.msra.mxu0 %v187
    %1395 = vmatmul.f32.gmra.mxu0 %v1377
    %v1396 = vpop.f32.mrf.mxu0
    %v1397 = vadd.f32 %v207, %v1396
    %1398 = vdwg.mxu0
    %1399 = vmatpush.msra.mxu0 0.0
    %1400 = vmatpush.msra.mxu0 0.0
    %1401 = vmatpush.msra.mxu0 0.0
    %1402 = vmatpush.msra.mxu0 0.0
    %1403 = vmatpush.msra.mxu0 0.0
    %1404 = vmatpush.msra.mxu0 0.0
    %1405 = vmatpush.msra.mxu0 0.0
    %1406 = vmatpush.msra.mxu0 0.0
    %1407 = vmatpush.msra.mxu0 0.0
    %1408 = vmatpush.msra.mxu0 0.0
    %1409 = vmatpush.msra.mxu0 0.0
    %1410 = vmatpush.msra.mxu0 0.0
    %1411 = vmatpush.msra.mxu0 %v195
    %1412 = vmatpush.msra.mxu0 %v194
    %1413 = vmatpush.msra.mxu0 %v193
    %1414 = vmatpush.msra.mxu0 %v192
    %1415 = vmatmul.f32.gmra.mxu0 %v1377
    %v1416 = vpop.f32.mrf.mxu0
    %v1417 = vadd.f32 %v234, %v1416
    %1418 = vdwg.mxu0
    %1419 = vmatpush.msra.mxu0 0.0
    %1420 = vmatpush.msra.mxu0 0.0
    %1421 = vmatpush.msra.mxu0 0.0
    %1422 = vmatpush.msra.mxu0 0.0
    %1423 = vmatpush.msra.mxu0 0.0
    %1424 = vmatpush.msra.mxu0 0.0
    %1425 = vmatpush.msra.mxu0 0.0
    %1426 = vmatpush.msra.mxu0 0.0
    %1427 = vmatpush.msra.mxu0 0.0
    %1428 = vmatpush.msra.mxu0 0.0
    %1429 = vmatpush.msra.mxu0 0.0
    %1430 = vmatpush.msra.mxu0 0.0
    %1431 = vmatpush.msra.mxu0 %v200
    %1432 = vmatpush.msra.mxu0 %v199
    %1433 = vmatpush.msra.mxu0 %v198
    %1434 = vmatpush.msra.mxu0 %v197
    %1435 = vmatmul.f32.gmra.mxu0 %v1377
    %v1436 = vpop.f32.mrf.mxu0
    %v1437 = vadd.f32 %v257, %v1436
    %1438 = vdwg.mxu0
    %v1440 = vrot.slane %v1397, 4
    %v1441 = vrot.slane %v1397, 5
    %v1442 = vrot.slane %v1397, 6
    %v1443 = vrot.slane %v1397, 7
    %v1448 = vadd.f32 %v102, %v1440
    %v1449 = vadd.f32 %v105, %v1441
    %v1450 = vadd.f32 %v108, %v1442
    %v1451 = vadd.f32 %v111, %v1443
    %v1452 = vxor.u32 %v1448, 2147483648
    %v1453 = vxor.u32 %v1449, 2147483648
    %v1454 = vxor.u32 %v1450, 2147483648
    %v1455 = vxor.u32 %v1451, 2147483648
    %v1456 = vmul.f32 %v1452, 1.442695
    %v1457 = vpow.pop %v1456
    %v1458 = vmul.f32 %v1453, 1.442695
    %v1459 = vpow.pop %v1458
    %v1460 = vmul.f32 %v1454, 1.442695
    %v1461 = vpow.pop %v1460
    %v1462 = vmul.f32 %v1455, 1.442695
    %v1463 = vpow.pop %v1462
    %v1464 = vadd.f32 %v1457, 1.0
    %v1465 = vadd.f32 %v1459, 1.0
    %v1466 = vadd.f32 %v1461, 1.0
    %v1467 = vadd.f32 %v1463, 1.0
    %v1468 = vrcp.pop %v1464
    %v1469 = vmul.f32 %v1464, %v1468
    %v1470 = vsub.f32 1.0, %v1469
    %v1471 = vmul.f32 %v1468, %v1470
    %v1472 = vadd.f32 %v1468, %v1471
    %vm1473 = vweird.f32 %v1464
    %vm1474 = vweird.f32 %v1468
    %vm1475 = vmor %vm1473, %vm1474
    %v1476 = vsel %vm1475, %v1468, %v1472
    %v1477 = vand.u32 2147483647, %v1464
    %vm1478 = vcmp.eq.f32.partialorder %v1477, 8.507059e+37
    %v1479 = vand.u32 %v1464, 2147483648
    %v1480 = vor.u32 1.1754944e-38, %v1479
    %v1481 = vsel %vm1478, %v1480, %v1476
    %v1482 = vmul.f32 1.0, %v1481
    %v1483 = vrcp.pop %v1465
    %v1484 = vmul.f32 %v1465, %v1483
    %v1485 = vsub.f32 1.0, %v1484
    %v1486 = vmul.f32 %v1483, %v1485
    %v1487 = vadd.f32 %v1483, %v1486
    %vm1488 = vweird.f32 %v1465
    %vm1489 = vweird.f32 %v1483
    %vm1490 = vmor %vm1488, %vm1489
    %v1491 = vsel %vm1490, %v1483, %v1487
    %v1492 = vand.u32 2147483647, %v1465
    %vm1493 = vcmp.eq.f32.partialorder %v1492, 8.507059e+37
    %v1494 = vand.u32 %v1465, 2147483648
    %v1495 = vor.u32 1.1754944e-38, %v1494
    %v1496 = vsel %vm1493, %v1495, %v1491
    %v1497 = vmul.f32 1.0, %v1496
    %v1498 = vrcp.pop %v1466
    %v1499 = vmul.f32 %v1466, %v1498
    %v1500 = vsub.f32 1.0, %v1499
    %v1501 = vmul.f32 %v1498, %v1500
    %v1502 = vadd.f32 %v1498, %v1501
    %vm1503 = vweird.f32 %v1466
    %vm1504 = vweird.f32 %v1498
    %vm1505 = vmor %vm1503, %vm1504
    %v1506 = vsel %vm1505, %v1498, %v1502
    %v1507 = vand.u32 2147483647, %v1466
    %vm1508 = vcmp.eq.f32.partialorder %v1507, 8.507059e+37
    %v1509 = vand.u32 %v1466, 2147483648
    %v1510 = vor.u32 1.1754944e-38, %v1509
    %v1511 = vsel %vm1508, %v1510, %v1506
    %v1512 = vmul.f32 1.0, %v1511
    %v1513 = vrcp.pop %v1467
    %v1514 = vmul.f32 %v1467, %v1513
    %v1515 = vsub.f32 1.0, %v1514
    %v1516 = vmul.f32 %v1513, %v1515
    %v1517 = vadd.f32 %v1513, %v1516
    %vm1518 = vweird.f32 %v1467
    %vm1519 = vweird.f32 %v1513
    %vm1520 = vmor %vm1518, %vm1519
    %v1521 = vsel %vm1520, %v1513, %v1517
    %v1522 = vand.u32 2147483647, %v1467
    %vm1523 = vcmp.eq.f32.partialorder %v1522, 8.507059e+37
    %v1524 = vand.u32 %v1467, 2147483648
    %v1525 = vor.u32 1.1754944e-38, %v1524
    %v1526 = vsel %vm1523, %v1525, %v1521
    %v1527 = vmul.f32 1.0, %v1526
    %v1529 = vrot.slane %v1417, 4
    %v1530 = vrot.slane %v1417, 5
    %v1531 = vrot.slane %v1417, 6
    %v1532 = vrot.slane %v1417, 7
    %v1537 = vadd.f32 %v139, %v1529
    %v1538 = vadd.f32 %v142, %v1530
    %v1539 = vadd.f32 %v145, %v1531
    %v1540 = vadd.f32 %v148, %v1532
    %v1541 = vxor.u32 %v1537, 2147483648
    %v1542 = vxor.u32 %v1538, 2147483648
    %v1543 = vxor.u32 %v1539, 2147483648
    %v1544 = vxor.u32 %v1540, 2147483648
    %v1545 = vmul.f32 %v1541, 1.442695
    %v1546 = vpow.pop %v1545
    %v1547 = vmul.f32 %v1542, 1.442695
    %v1548 = vpow.pop %v1547
    %v1549 = vmul.f32 %v1543, 1.442695
    %v1550 = vpow.pop %v1549
    %v1551 = vmul.f32 %v1544, 1.442695
    %v1552 = vpow.pop %v1551
    %v1553 = vadd.f32 %v1546, 1.0
    %v1554 = vadd.f32 %v1548, 1.0
    %v1555 = vadd.f32 %v1550, 1.0
    %v1556 = vadd.f32 %v1552, 1.0
    %v1557 = vrcp.pop %v1553
    %v1558 = vmul.f32 %v1553, %v1557
    %v1559 = vsub.f32 1.0, %v1558
    %v1560 = vmul.f32 %v1557, %v1559
    %v1561 = vadd.f32 %v1557, %v1560
    %vm1562 = vweird.f32 %v1553
    %vm1563 = vweird.f32 %v1557
    %vm1564 = vmor %vm1562, %vm1563
    %v1565 = vsel %vm1564, %v1557, %v1561
    %v1566 = vand.u32 2147483647, %v1553
    %vm1567 = vcmp.eq.f32.partialorder %v1566, 8.507059e+37
    %v1568 = vand.u32 %v1553, 2147483648
    %v1569 = vor.u32 1.1754944e-38, %v1568
    %v1570 = vsel %vm1567, %v1569, %v1565
    %v1571 = vmul.f32 1.0, %v1570
    %v1572 = vrcp.pop %v1554
    %v1573 = vmul.f32 %v1554, %v1572
    %v1574 = vsub.f32 1.0, %v1573
    %v1575 = vmul.f32 %v1572, %v1574
    %v1576 = vadd.f32 %v1572, %v1575
    %vm1577 = vweird.f32 %v1554
    %vm1578 = vweird.f32 %v1572
    %vm1579 = vmor %vm1577, %vm1578
    %v1580 = vsel %vm1579, %v1572, %v1576
    %v1581 = vand.u32 2147483647, %v1554
    %vm1582 = vcmp.eq.f32.partialorder %v1581, 8.507059e+37
    %v1583 = vand.u32 %v1554, 2147483648
    %v1584 = vor.u32 1.1754944e-38, %v1583
    %v1585 = vsel %vm1582, %v1584, %v1580
    %v1586 = vmul.f32 1.0, %v1585
    %v1587 = vrcp.pop %v1555
    %v1588 = vmul.f32 %v1555, %v1587
    %v1589 = vsub.f32 1.0, %v1588
    %v1590 = vmul.f32 %v1587, %v1589
    %v1591 = vadd.f32 %v1587, %v1590
    %vm1592 = vweird.f32 %v1555
    %vm1593 = vweird.f32 %v1587
    %vm1594 = vmor %vm1592, %vm1593
    %v1595 = vsel %vm1594, %v1587, %v1591
    %v1596 = vand.u32 2147483647, %v1555
    %vm1597 = vcmp.eq.f32.partialorder %v1596, 8.507059e+37
    %v1598 = vand.u32 %v1555, 2147483648
    %v1599 = vor.u32 1.1754944e-38, %v1598
    %v1600 = vsel %vm1597, %v1599, %v1595
    %v1601 = vmul.f32 1.0, %v1600
    %v1602 = vrcp.pop %v1556
    %v1603 = vmul.f32 %v1556, %v1602
    %v1604 = vsub.f32 1.0, %v1603
    %v1605 = vmul.f32 %v1602, %v1604
    %v1606 = vadd.f32 %v1602, %v1605
    %vm1607 = vweird.f32 %v1556
    %vm1608 = vweird.f32 %v1602
    %vm1609 = vmor %vm1607, %vm1608
    %v1610 = vsel %vm1609, %v1602, %v1606
    %v1611 = vand.u32 2147483647, %v1556
    %vm1612 = vcmp.eq.f32.partialorder %v1611, 8.507059e+37
    %v1613 = vand.u32 %v1556, 2147483648
    %v1614 = vor.u32 1.1754944e-38, %v1613
    %v1615 = vsel %vm1612, %v1614, %v1610
    %v1616 = vmul.f32 1.0, %v1615
    %v1618 = vrot.slane %v1437, 4
    %v1619 = vrot.slane %v1437, 5
    %v1620 = vrot.slane %v1437, 6
    %v1621 = vrot.slane %v1437, 7
    %v1626 = vmul.f32 %v1482, %v1618
    %v1627 = vmul.f32 %v1497, %v1619
    %v1628 = vmul.f32 %v1512, %v1620
    %v1629 = vmul.f32 %v1527, %v1621
    %v1630 = vadd.f32 %v176, %v1626
    %v1631 = vadd.f32 %v179, %v1627
    %v1632 = vadd.f32 %v182, %v1628
    %v1633 = vadd.f32 %v185, %v1629
    %v1634 = vtanh.pop %v1630
    %v1635 = vtanh.pop %v1631
    %v1636 = vtanh.pop %v1632
    %v1637 = vtanh.pop %v1633
    %v1638 = vsub.f32 1.0, %v1571
    %v1639 = vsub.f32 1.0, %v1586
    %v1640 = vsub.f32 1.0, %v1601
    %v1641 = vsub.f32 1.0, %v1616
    %v1642 = vmul.f32 %v1638, %v1634
    %v1643 = vmul.f32 %v1639, %v1635
    %v1644 = vmul.f32 %v1640, %v1636
    %v1645 = vmul.f32 %v1641, %v1637
    %v1646 = vrot.slane %v1363, 7
    %v1647 = vrot.slane %v1364, 7
    %v1648 = vrot.slane %v1365, 7
    %v1649 = vrot.slane %v1366, 7
    %v1654 = vmul.f32 %v1571, %v1646
    %v1655 = vmul.f32 %v1586, %v1647
    %v1656 = vmul.f32 %v1601, %v1648
    %v1657 = vmul.f32 %v1616, %v1649
    %v1658 = vadd.f32 %v1642, %v1654
    %v1659 = vadd.f32 %v1643, %v1655
    %v1660 = vadd.f32 %v1644, %v1656
    %v1661 = vadd.f32 %v1645, %v1657
    %v1666 = vrot.slane %v1658, 4
    %v1667 = vrot.slane %v1659, 3
    %v1668 = vsel %vm496, %v1667, %v1666
    %v1669 = vrot.slane %v1660, 2
    %v1670 = vsel %vm499, %v1669, %v1668
    %v1671 = vrot.slane %v1661, 1
    %v1672 = vsel %vm502, %v1671, %v1670
    %v1673 = vsel %vm209, %v1672, 0
    %1675 = vmatpush.msra.mxu0 0.0
    %1676 = vmatpush.msra.mxu0 0.0
    %1677 = vmatpush.msra.mxu0 0.0
    %1678 = vmatpush.msra.mxu0 0.0
    %1679 = vmatpush.msra.mxu0 0.0
    %1680 = vmatpush.msra.mxu0 0.0
    %1681 = vmatpush.msra.mxu0 0.0
    %1682 = vmatpush.msra.mxu0 0.0
    %1683 = vmatpush.msra.mxu0 0.0
    %1684 = vmatpush.msra.mxu0 0.0
    %1685 = vmatpush.msra.mxu0 0.0
    %1686 = vmatpush.msra.mxu0 0.0
    %1687 = vmatpush.msra.mxu0 %v190
    %1688 = vmatpush.msra.mxu0 %v189
    %1689 = vmatpush.msra.mxu0 %v188
    %1690 = vmatpush.msra.mxu0 %v187
    %1691 = vmatmul.f32.gmra.mxu0 %v1673
    %v1692 = vpop.f32.mrf.mxu0
    %v1693 = vadd.f32 %v207, %v1692
    %1694 = vdwg.mxu0
    %1695 = vmatpush.msra.mxu0 0.0
    %1696 = vmatpush.msra.mxu0 0.0
    %1697 = vmatpush.msra.mxu0 0.0
    %1698 = vmatpush.msra.mxu0 0.0
    %1699 = vmatpush.msra.mxu0 0.0
    %1700 = vmatpush.msra.mxu0 0.0
    %1701 = vmatpush.msra.mxu0 0.0
    %1702 = vmatpush.msra.mxu0 0.0
    %1703 = vmatpush.msra.mxu0 0.0
    %1704 = vmatpush.msra.mxu0 0.0
    %1705 = vmatpush.msra.mxu0 0.0
    %1706 = vmatpush.msra.mxu0 0.0
    %1707 = vmatpush.msra.mxu0 %v195
    %1708 = vmatpush.msra.mxu0 %v194
    %1709 = vmatpush.msra.mxu0 %v193
    %1710 = vmatpush.msra.mxu0 %v192
    %1711 = vmatmul.f32.gmra.mxu0 %v1673
    %v1712 = vpop.f32.mrf.mxu0
    %v1713 = vadd.f32 %v234, %v1712
    %1714 = vdwg.mxu0
    %1715 = vmatpush.msra.mxu0 0.0
    %1716 = vmatpush.msra.mxu0 0.0
    %1717 = vmatpush.msra.mxu0 0.0
    %1718 = vmatpush.msra.mxu0 0.0
    %1719 = vmatpush.msra.mxu0 0.0
    %1720 = vmatpush.msra.mxu0 0.0
    %1721 = vmatpush.msra.mxu0 0.0
    %1722 = vmatpush.msra.mxu0 0.0
    %1723 = vmatpush.msra.mxu0 0.0
    %1724 = vmatpush.msra.mxu0 0.0
    %1725 = vmatpush.msra.mxu0 0.0
    %1726 = vmatpush.msra.mxu0 0.0
    %1727 = vmatpush.msra.mxu0 %v200
    %1728 = vmatpush.msra.mxu0 %v199
    %1729 = vmatpush.msra.mxu0 %v198
    %1730 = vmatpush.msra.mxu0 %v197
    %1731 = vmatmul.f32.gmra.mxu0 %v1673
    %v1732 = vpop.f32.mrf.mxu0
    %v1733 = vadd.f32 %v257, %v1732
    %1734 = vdwg.mxu0
    %v1736 = vrot.slane %v1693, 3
    %v1737 = vrot.slane %v1693, 4
    %v1738 = vrot.slane %v1693, 5
    %v1739 = vrot.slane %v1693, 6
    %v1744 = vadd.f32 %v102, %v1736
    %v1745 = vadd.f32 %v105, %v1737
    %v1746 = vadd.f32 %v108, %v1738
    %v1747 = vadd.f32 %v111, %v1739
    %v1748 = vxor.u32 %v1744, 2147483648
    %v1749 = vxor.u32 %v1745, 2147483648
    %v1750 = vxor.u32 %v1746, 2147483648
    %v1751 = vxor.u32 %v1747, 2147483648
    %v1752 = vmul.f32 %v1748, 1.442695
    %v1753 = vpow.pop %v1752
    %v1754 = vmul.f32 %v1749, 1.442695
    %v1755 = vpow.pop %v1754
    %v1756 = vmul.f32 %v1750, 1.442695
    %v1757 = vpow.pop %v1756
    %v1758 = vmul.f32 %v1751, 1.442695
    %v1759 = vpow.pop %v1758
    %v1760 = vadd.f32 %v1753, 1.0
    %v1761 = vadd.f32 %v1755, 1.0
    %v1762 = vadd.f32 %v1757, 1.0
    %v1763 = vadd.f32 %v1759, 1.0
    %v1764 = vrcp.pop %v1760
    %v1765 = vmul.f32 %v1760, %v1764
    %v1766 = vsub.f32 1.0, %v1765
    %v1767 = vmul.f32 %v1764, %v1766
    %v1768 = vadd.f32 %v1764, %v1767
    %vm1769 = vweird.f32 %v1760
    %vm1770 = vweird.f32 %v1764
    %vm1771 = vmor %vm1769, %vm1770
    %v1772 = vsel %vm1771, %v1764, %v1768
    %v1773 = vand.u32 2147483647, %v1760
    %vm1774 = vcmp.eq.f32.partialorder %v1773, 8.507059e+37
    %v1775 = vand.u32 %v1760, 2147483648
    %v1776 = vor.u32 1.1754944e-38, %v1775
    %v1777 = vsel %vm1774, %v1776, %v1772
    %v1778 = vmul.f32 1.0, %v1777
    %v1779 = vrcp.pop %v1761
    %v1780 = vmul.f32 %v1761, %v1779
    %v1781 = vsub.f32 1.0, %v1780
    %v1782 = vmul.f32 %v1779, %v1781
    %v1783 = vadd.f32 %v1779, %v1782
    %vm1784 = vweird.f32 %v1761
    %vm1785 = vweird.f32 %v1779
    %vm1786 = vmor %vm1784, %vm1785
    %v1787 = vsel %vm1786, %v1779, %v1783
    %v1788 = vand.u32 2147483647, %v1761
    %vm1789 = vcmp.eq.f32.partialorder %v1788, 8.507059e+37
    %v1790 = vand.u32 %v1761, 2147483648
    %v1791 = vor.u32 1.1754944e-38, %v1790
    %v1792 = vsel %vm1789, %v1791, %v1787
    %v1793 = vmul.f32 1.0, %v1792
    %v1794 = vrcp.pop %v1762
    %v1795 = vmul.f32 %v1762, %v1794
    %v1796 = vsub.f32 1.0, %v1795
    %v1797 = vmul.f32 %v1794, %v1796
    %v1798 = vadd.f32 %v1794, %v1797
    %vm1799 = vweird.f32 %v1762
    %vm1800 = vweird.f32 %v1794
    %vm1801 = vmor %vm1799, %vm1800
    %v1802 = vsel %vm1801, %v1794, %v1798
    %v1803 = vand.u32 2147483647, %v1762
    %vm1804 = vcmp.eq.f32.partialorder %v1803, 8.507059e+37
    %v1805 = vand.u32 %v1762, 2147483648
    %v1806 = vor.u32 1.1754944e-38, %v1805
    %v1807 = vsel %vm1804, %v1806, %v1802
    %v1808 = vmul.f32 1.0, %v1807
    %v1809 = vrcp.pop %v1763
    %v1810 = vmul.f32 %v1763, %v1809
    %v1811 = vsub.f32 1.0, %v1810
    %v1812 = vmul.f32 %v1809, %v1811
    %v1813 = vadd.f32 %v1809, %v1812
    %vm1814 = vweird.f32 %v1763
    %vm1815 = vweird.f32 %v1809
    %vm1816 = vmor %vm1814, %vm1815
    %v1817 = vsel %vm1816, %v1809, %v1813
    %v1818 = vand.u32 2147483647, %v1763
    %vm1819 = vcmp.eq.f32.partialorder %v1818, 8.507059e+37
    %v1820 = vand.u32 %v1763, 2147483648
    %v1821 = vor.u32 1.1754944e-38, %v1820
    %v1822 = vsel %vm1819, %v1821, %v1817
    %v1823 = vmul.f32 1.0, %v1822
    %v1825 = vrot.slane %v1713, 3
    %v1826 = vrot.slane %v1713, 4
    %v1827 = vrot.slane %v1713, 5
    %v1828 = vrot.slane %v1713, 6
    %v1833 = vadd.f32 %v139, %v1825
    %v1834 = vadd.f32 %v142, %v1826
    %v1835 = vadd.f32 %v145, %v1827
    %v1836 = vadd.f32 %v148, %v1828
    %v1837 = vxor.u32 %v1833, 2147483648
    %v1838 = vxor.u32 %v1834, 2147483648
    %v1839 = vxor.u32 %v1835, 2147483648
    %v1840 = vxor.u32 %v1836, 2147483648
    %v1841 = vmul.f32 %v1837, 1.442695
    %v1842 = vpow.pop %v1841
    %v1843 = vmul.f32 %v1838, 1.442695
    %v1844 = vpow.pop %v1843
    %v1845 = vmul.f32 %v1839, 1.442695
    %v1846 = vpow.pop %v1845
    %v1847 = vmul.f32 %v1840, 1.442695
    %v1848 = vpow.pop %v1847
    %v1849 = vadd.f32 %v1842, 1.0
    %v1850 = vadd.f32 %v1844, 1.0
    %v1851 = vadd.f32 %v1846, 1.0
    %v1852 = vadd.f32 %v1848, 1.0
    %v1853 = vrcp.pop %v1849
    %v1854 = vmul.f32 %v1849, %v1853
    %v1855 = vsub.f32 1.0, %v1854
    %v1856 = vmul.f32 %v1853, %v1855
    %v1857 = vadd.f32 %v1853, %v1856
    %vm1858 = vweird.f32 %v1849
    %vm1859 = vweird.f32 %v1853
    %vm1860 = vmor %vm1858, %vm1859
    %v1861 = vsel %vm1860, %v1853, %v1857
    %v1862 = vand.u32 2147483647, %v1849
    %vm1863 = vcmp.eq.f32.partialorder %v1862, 8.507059e+37
    %v1864 = vand.u32 %v1849, 2147483648
    %v1865 = vor.u32 1.1754944e-38, %v1864
    %v1866 = vsel %vm1863, %v1865, %v1861
    %v1867 = vmul.f32 1.0, %v1866
    %v1868 = vrcp.pop %v1850
    %v1869 = vmul.f32 %v1850, %v1868
    %v1870 = vsub.f32 1.0, %v1869
    %v1871 = vmul.f32 %v1868, %v1870
    %v1872 = vadd.f32 %v1868, %v1871
    %vm1873 = vweird.f32 %v1850
    %vm1874 = vweird.f32 %v1868
    %vm1875 = vmor %vm1873, %vm1874
    %v1876 = vsel %vm1875, %v1868, %v1872
    %v1877 = vand.u32 2147483647, %v1850
    %vm1878 = vcmp.eq.f32.partialorder %v1877, 8.507059e+37
    %v1879 = vand.u32 %v1850, 2147483648
    %v1880 = vor.u32 1.1754944e-38, %v1879
    %v1881 = vsel %vm1878, %v1880, %v1876
    %v1882 = vmul.f32 1.0, %v1881
    %v1883 = vrcp.pop %v1851
    %v1884 = vmul.f32 %v1851, %v1883
    %v1885 = vsub.f32 1.0, %v1884
    %v1886 = vmul.f32 %v1883, %v1885
    %v1887 = vadd.f32 %v1883, %v1886
    %vm1888 = vweird.f32 %v1851
    %vm1889 = vweird.f32 %v1883
    %vm1890 = vmor %vm1888, %vm1889
    %v1891 = vsel %vm1890, %v1883, %v1887
    %v1892 = vand.u32 2147483647, %v1851
    %vm1893 = vcmp.eq.f32.partialorder %v1892, 8.507059e+37
    %v1894 = vand.u32 %v1851, 2147483648
    %v1895 = vor.u32 1.1754944e-38, %v1894
    %v1896 = vsel %vm1893, %v1895, %v1891
    %v1897 = vmul.f32 1.0, %v1896
    %v1898 = vrcp.pop %v1852
    %v1899 = vmul.f32 %v1852, %v1898
    %v1900 = vsub.f32 1.0, %v1899
    %v1901 = vmul.f32 %v1898, %v1900
    %v1902 = vadd.f32 %v1898, %v1901
    %vm1903 = vweird.f32 %v1852
    %vm1904 = vweird.f32 %v1898
    %vm1905 = vmor %vm1903, %vm1904
    %v1906 = vsel %vm1905, %v1898, %v1902
    %v1907 = vand.u32 2147483647, %v1852
    %vm1908 = vcmp.eq.f32.partialorder %v1907, 8.507059e+37
    %v1909 = vand.u32 %v1852, 2147483648
    %v1910 = vor.u32 1.1754944e-38, %v1909
    %v1911 = vsel %vm1908, %v1910, %v1906
    %v1912 = vmul.f32 1.0, %v1911
    %v1914 = vrot.slane %v1733, 3
    %v1915 = vrot.slane %v1733, 4
    %v1916 = vrot.slane %v1733, 5
    %v1917 = vrot.slane %v1733, 6
    %v1922 = vmul.f32 %v1778, %v1914
    %v1923 = vmul.f32 %v1793, %v1915
    %v1924 = vmul.f32 %v1808, %v1916
    %v1925 = vmul.f32 %v1823, %v1917
    %v1926 = vadd.f32 %v176, %v1922
    %v1927 = vadd.f32 %v179, %v1923
    %v1928 = vadd.f32 %v182, %v1924
    %v1929 = vadd.f32 %v185, %v1925
    %v1930 = vtanh.pop %v1926
    %v1931 = vtanh.pop %v1927
    %v1932 = vtanh.pop %v1928
    %v1933 = vtanh.pop %v1929
    %v1934 = vsub.f32 1.0, %v1867
    %v1935 = vsub.f32 1.0, %v1882
    %v1936 = vsub.f32 1.0, %v1897
    %v1937 = vsub.f32 1.0, %v1912
    %v1938 = vmul.f32 %v1934, %v1930
    %v1939 = vmul.f32 %v1935, %v1931
    %v1940 = vmul.f32 %v1936, %v1932
    %v1941 = vmul.f32 %v1937, %v1933
    %v1942 = vrot.slane %v1658, 7
    %v1943 = vrot.slane %v1659, 7
    %v1944 = vrot.slane %v1660, 7
    %v1945 = vrot.slane %v1661, 7
    %v1950 = vmul.f32 %v1867, %v1942
    %v1951 = vmul.f32 %v1882, %v1943
    %v1952 = vmul.f32 %v1897, %v1944
    %v1953 = vmul.f32 %v1912, %v1945
    %v1954 = vadd.f32 %v1938, %v1950
    %v1955 = vadd.f32 %v1939, %v1951
    %v1956 = vadd.f32 %v1940, %v1952
    %v1957 = vadd.f32 %v1941, %v1953
    %v1962 = vrot.slane %v1954, 5
    %v1963 = vrot.slane %v1955, 4
    %v1964 = vsel %vm496, %v1963, %v1962
    %v1965 = vrot.slane %v1956, 3
    %v1966 = vsel %vm499, %v1965, %v1964
    %v1967 = vrot.slane %v1957, 2
    %v1968 = vsel %vm502, %v1967, %v1966
    %v1969 = vsel %vm209, %v1968, 0
    %1971 = vmatpush.msra.mxu0 0.0
    %1972 = vmatpush.msra.mxu0 0.0
    %1973 = vmatpush.msra.mxu0 0.0
    %1974 = vmatpush.msra.mxu0 0.0
    %1975 = vmatpush.msra.mxu0 0.0
    %1976 = vmatpush.msra.mxu0 0.0
    %1977 = vmatpush.msra.mxu0 0.0
    %1978 = vmatpush.msra.mxu0 0.0
    %1979 = vmatpush.msra.mxu0 0.0
    %1980 = vmatpush.msra.mxu0 0.0
    %1981 = vmatpush.msra.mxu0 0.0
    %1982 = vmatpush.msra.mxu0 0.0
    %1983 = vmatpush.msra.mxu0 %v190
    %1984 = vmatpush.msra.mxu0 %v189
    %1985 = vmatpush.msra.mxu0 %v188
    %1986 = vmatpush.msra.mxu0 %v187
    %1987 = vmatmul.f32.gmra.mxu0 %v1969
    %v1988 = vpop.f32.mrf.mxu0
    %v1989 = vadd.f32 %v207, %v1988
    %1990 = vdwg.mxu0
    %1991 = vmatpush.msra.mxu0 0.0
    %1992 = vmatpush.msra.mxu0 0.0
    %1993 = vmatpush.msra.mxu0 0.0
    %1994 = vmatpush.msra.mxu0 0.0
    %1995 = vmatpush.msra.mxu0 0.0
    %1996 = vmatpush.msra.mxu0 0.0
    %1997 = vmatpush.msra.mxu0 0.0
    %1998 = vmatpush.msra.mxu0 0.0
    %1999 = vmatpush.msra.mxu0 0.0
    %2000 = vmatpush.msra.mxu0 0.0
    %2001 = vmatpush.msra.mxu0 0.0
    %2002 = vmatpush.msra.mxu0 0.0
    %2003 = vmatpush.msra.mxu0 %v195
    %2004 = vmatpush.msra.mxu0 %v194
    %2005 = vmatpush.msra.mxu0 %v193
    %2006 = vmatpush.msra.mxu0 %v192
    %2007 = vmatmul.f32.gmra.mxu0 %v1969
    %v2008 = vpop.f32.mrf.mxu0
    %v2009 = vadd.f32 %v234, %v2008
    %2010 = vdwg.mxu0
    %2011 = vmatpush.msra.mxu0 0.0
    %2012 = vmatpush.msra.mxu0 0.0
    %2013 = vmatpush.msra.mxu0 0.0
    %2014 = vmatpush.msra.mxu0 0.0
    %2015 = vmatpush.msra.mxu0 0.0
    %2016 = vmatpush.msra.mxu0 0.0
    %2017 = vmatpush.msra.mxu0 0.0
    %2018 = vmatpush.msra.mxu0 0.0
    %2019 = vmatpush.msra.mxu0 0.0
    %2020 = vmatpush.msra.mxu0 0.0
    %2021 = vmatpush.msra.mxu0 0.0
    %2022 = vmatpush.msra.mxu0 0.0
    %2023 = vmatpush.msra.mxu0 %v200
    %2024 = vmatpush.msra.mxu0 %v199
    %2025 = vmatpush.msra.mxu0 %v198
    %2026 = vmatpush.msra.mxu0 %v197
    %2027 = vmatmul.f32.gmra.mxu0 %v1969
    %v2028 = vpop.f32.mrf.mxu0
    %v2029 = vadd.f32 %v257, %v2028
    %2030 = vdwg.mxu0
    %v2032 = vrot.slane %v1989, 2
    %v2033 = vrot.slane %v1989, 3
    %v2034 = vrot.slane %v1989, 4
    %v2035 = vrot.slane %v1989, 5
    %v2040 = vadd.f32 %v102, %v2032
    %v2041 = vadd.f32 %v105, %v2033
    %v2042 = vadd.f32 %v108, %v2034
    %v2043 = vadd.f32 %v111, %v2035
    %v2044 = vxor.u32 %v2040, 2147483648
    %v2045 = vxor.u32 %v2041, 2147483648
    %v2046 = vxor.u32 %v2042, 2147483648
    %v2047 = vxor.u32 %v2043, 2147483648
    %v2048 = vmul.f32 %v2044, 1.442695
    %v2049 = vpow.pop %v2048
    %v2050 = vmul.f32 %v2045, 1.442695
    %v2051 = vpow.pop %v2050
    %v2052 = vmul.f32 %v2046, 1.442695
    %v2053 = vpow.pop %v2052
    %v2054 = vmul.f32 %v2047, 1.442695
    %v2055 = vpow.pop %v2054
    %v2056 = vadd.f32 %v2049, 1.0
    %v2057 = vadd.f32 %v2051, 1.0
    %v2058 = vadd.f32 %v2053, 1.0
    %v2059 = vadd.f32 %v2055, 1.0
    %v2060 = vrcp.pop %v2056
    %v2061 = vmul.f32 %v2056, %v2060
    %v2062 = vsub.f32 1.0, %v2061
    %v2063 = vmul.f32 %v2060, %v2062
    %v2064 = vadd.f32 %v2060, %v2063
    %vm2065 = vweird.f32 %v2056
    %vm2066 = vweird.f32 %v2060
    %vm2067 = vmor %vm2065, %vm2066
    %v2068 = vsel %vm2067, %v2060, %v2064
    %v2069 = vand.u32 2147483647, %v2056
    %vm2070 = vcmp.eq.f32.partialorder %v2069, 8.507059e+37
    %v2071 = vand.u32 %v2056, 2147483648
    %v2072 = vor.u32 1.1754944e-38, %v2071
    %v2073 = vsel %vm2070, %v2072, %v2068
    %v2074 = vmul.f32 1.0, %v2073
    %v2075 = vrcp.pop %v2057
    %v2076 = vmul.f32 %v2057, %v2075
    %v2077 = vsub.f32 1.0, %v2076
    %v2078 = vmul.f32 %v2075, %v2077
    %v2079 = vadd.f32 %v2075, %v2078
    %vm2080 = vweird.f32 %v2057
    %vm2081 = vweird.f32 %v2075
    %vm2082 = vmor %vm2080, %vm2081
    %v2083 = vsel %vm2082, %v2075, %v2079
    %v2084 = vand.u32 2147483647, %v2057
    %vm2085 = vcmp.eq.f32.partialorder %v2084, 8.507059e+37
    %v2086 = vand.u32 %v2057, 2147483648
    %v2087 = vor.u32 1.1754944e-38, %v2086
    %v2088 = vsel %vm2085, %v2087, %v2083
    %v2089 = vmul.f32 1.0, %v2088
    %v2090 = vrcp.pop %v2058
    %v2091 = vmul.f32 %v2058, %v2090
    %v2092 = vsub.f32 1.0, %v2091
    %v2093 = vmul.f32 %v2090, %v2092
    %v2094 = vadd.f32 %v2090, %v2093
    %vm2095 = vweird.f32 %v2058
    %vm2096 = vweird.f32 %v2090
    %vm2097 = vmor %vm2095, %vm2096
    %v2098 = vsel %vm2097, %v2090, %v2094
    %v2099 = vand.u32 2147483647, %v2058
    %vm2100 = vcmp.eq.f32.partialorder %v2099, 8.507059e+37
    %v2101 = vand.u32 %v2058, 2147483648
    %v2102 = vor.u32 1.1754944e-38, %v2101
    %v2103 = vsel %vm2100, %v2102, %v2098
    %v2104 = vmul.f32 1.0, %v2103
    %v2105 = vrcp.pop %v2059
    %v2106 = vmul.f32 %v2059, %v2105
    %v2107 = vsub.f32 1.0, %v2106
    %v2108 = vmul.f32 %v2105, %v2107
    %v2109 = vadd.f32 %v2105, %v2108
    %vm2110 = vweird.f32 %v2059
    %vm2111 = vweird.f32 %v2105
    %vm2112 = vmor %vm2110, %vm2111
    %v2113 = vsel %vm2112, %v2105, %v2109
    %v2114 = vand.u32 2147483647, %v2059
    %vm2115 = vcmp.eq.f32.partialorder %v2114, 8.507059e+37
    %v2116 = vand.u32 %v2059, 2147483648
    %v2117 = vor.u32 1.1754944e-38, %v2116
    %v2118 = vsel %vm2115, %v2117, %v2113
    %v2119 = vmul.f32 1.0, %v2118
    %v2121 = vrot.slane %v2009, 2
    %v2122 = vrot.slane %v2009, 3
    %v2123 = vrot.slane %v2009, 4
    %v2124 = vrot.slane %v2009, 5
    %v2129 = vadd.f32 %v139, %v2121
    %v2130 = vadd.f32 %v142, %v2122
    %v2131 = vadd.f32 %v145, %v2123
    %v2132 = vadd.f32 %v148, %v2124
    %v2133 = vxor.u32 %v2129, 2147483648
    %v2134 = vxor.u32 %v2130, 2147483648
    %v2135 = vxor.u32 %v2131, 2147483648
    %v2136 = vxor.u32 %v2132, 2147483648
    %v2137 = vmul.f32 %v2133, 1.442695
    %v2138 = vpow.pop %v2137
    %v2139 = vmul.f32 %v2134, 1.442695
    %v2140 = vpow.pop %v2139
    %v2141 = vmul.f32 %v2135, 1.442695
    %v2142 = vpow.pop %v2141
    %v2143 = vmul.f32 %v2136, 1.442695
    %v2144 = vpow.pop %v2143
    %v2145 = vadd.f32 %v2138, 1.0
    %v2146 = vadd.f32 %v2140, 1.0
    %v2147 = vadd.f32 %v2142, 1.0
    %v2148 = vadd.f32 %v2144, 1.0
    %v2149 = vrcp.pop %v2145
    %v2150 = vmul.f32 %v2145, %v2149
    %v2151 = vsub.f32 1.0, %v2150
    %v2152 = vmul.f32 %v2149, %v2151
    %v2153 = vadd.f32 %v2149, %v2152
    %vm2154 = vweird.f32 %v2145
    %vm2155 = vweird.f32 %v2149
    %vm2156 = vmor %vm2154, %vm2155
    %v2157 = vsel %vm2156, %v2149, %v2153
    %v2158 = vand.u32 2147483647, %v2145
    %vm2159 = vcmp.eq.f32.partialorder %v2158, 8.507059e+37
    %v2160 = vand.u32 %v2145, 2147483648
    %v2161 = vor.u32 1.1754944e-38, %v2160
    %v2162 = vsel %vm2159, %v2161, %v2157
    %v2163 = vmul.f32 1.0, %v2162
    %v2164 = vrcp.pop %v2146
    %v2165 = vmul.f32 %v2146, %v2164
    %v2166 = vsub.f32 1.0, %v2165
    %v2167 = vmul.f32 %v2164, %v2166
    %v2168 = vadd.f32 %v2164, %v2167
    %vm2169 = vweird.f32 %v2146
    %vm2170 = vweird.f32 %v2164
    %vm2171 = vmor %vm2169, %vm2170
    %v2172 = vsel %vm2171, %v2164, %v2168
    %v2173 = vand.u32 2147483647, %v2146
    %vm2174 = vcmp.eq.f32.partialorder %v2173, 8.507059e+37
    %v2175 = vand.u32 %v2146, 2147483648
    %v2176 = vor.u32 1.1754944e-38, %v2175
    %v2177 = vsel %vm2174, %v2176, %v2172
    %v2178 = vmul.f32 1.0, %v2177
    %v2179 = vrcp.pop %v2147
    %v2180 = vmul.f32 %v2147, %v2179
    %v2181 = vsub.f32 1.0, %v2180
    %v2182 = vmul.f32 %v2179, %v2181
    %v2183 = vadd.f32 %v2179, %v2182
    %vm2184 = vweird.f32 %v2147
    %vm2185 = vweird.f32 %v2179
    %vm2186 = vmor %vm2184, %vm2185
    %v2187 = vsel %vm2186, %v2179, %v2183
    %v2188 = vand.u32 2147483647, %v2147
    %vm2189 = vcmp.eq.f32.partialorder %v2188, 8.507059e+37
    %v2190 = vand.u32 %v2147, 2147483648
    %v2191 = vor.u32 1.1754944e-38, %v2190
    %v2192 = vsel %vm2189, %v2191, %v2187
    %v2193 = vmul.f32 1.0, %v2192
    %v2194 = vrcp.pop %v2148
    %v2195 = vmul.f32 %v2148, %v2194
    %v2196 = vsub.f32 1.0, %v2195
    %v2197 = vmul.f32 %v2194, %v2196
    %v2198 = vadd.f32 %v2194, %v2197
    %vm2199 = vweird.f32 %v2148
    %vm2200 = vweird.f32 %v2194
    %vm2201 = vmor %vm2199, %vm2200
    %v2202 = vsel %vm2201, %v2194, %v2198
    %v2203 = vand.u32 2147483647, %v2148
    %vm2204 = vcmp.eq.f32.partialorder %v2203, 8.507059e+37
    %v2205 = vand.u32 %v2148, 2147483648
    %v2206 = vor.u32 1.1754944e-38, %v2205
    %v2207 = vsel %vm2204, %v2206, %v2202
    %v2208 = vmul.f32 1.0, %v2207
    %v2210 = vrot.slane %v2029, 2
    %v2211 = vrot.slane %v2029, 3
    %v2212 = vrot.slane %v2029, 4
    %v2213 = vrot.slane %v2029, 5
    %v2218 = vmul.f32 %v2074, %v2210
    %v2219 = vmul.f32 %v2089, %v2211
    %v2220 = vmul.f32 %v2104, %v2212
    %v2221 = vmul.f32 %v2119, %v2213
    %v2222 = vadd.f32 %v176, %v2218
    %v2223 = vadd.f32 %v179, %v2219
    %v2224 = vadd.f32 %v182, %v2220
    %v2225 = vadd.f32 %v185, %v2221
    %v2226 = vtanh.pop %v2222
    %v2227 = vtanh.pop %v2223
    %v2228 = vtanh.pop %v2224
    %v2229 = vtanh.pop %v2225
    %v2230 = vsub.f32 1.0, %v2163
    %v2231 = vsub.f32 1.0, %v2178
    %v2232 = vsub.f32 1.0, %v2193
    %v2233 = vsub.f32 1.0, %v2208
    %v2234 = vmul.f32 %v2230, %v2226
    %v2235 = vmul.f32 %v2231, %v2227
    %v2236 = vmul.f32 %v2232, %v2228
    %v2237 = vmul.f32 %v2233, %v2229
    %v2238 = vrot.slane %v1954, 7
    %v2239 = vrot.slane %v1955, 7
    %v2240 = vrot.slane %v1956, 7
    %v2241 = vrot.slane %v1957, 7
    %v2246 = vmul.f32 %v2163, %v2238
    %v2247 = vmul.f32 %v2178, %v2239
    %v2248 = vmul.f32 %v2193, %v2240
    %v2249 = vmul.f32 %v2208, %v2241
    %v2250 = vadd.f32 %v2234, %v2246
    %v2251 = vadd.f32 %v2235, %v2247
    %v2252 = vadd.f32 %v2236, %v2248
    %v2253 = vadd.f32 %v2237, %v2249
    %v2258 = vrot.slane %v2250, 6
    %v2259 = vrot.slane %v2251, 5
    %v2260 = vsel %vm496, %v2259, %v2258
    %v2261 = vrot.slane %v2252, 4
    %v2262 = vsel %vm499, %v2261, %v2260
    %v2263 = vrot.slane %v2253, 3
    %v2264 = vsel %vm502, %v2263, %v2262
    %v2265 = vsel %vm209, %v2264, 0
    %2267 = vmatpush.msra.mxu0 0.0
    %2268 = vmatpush.msra.mxu0 0.0
    %2269 = vmatpush.msra.mxu0 0.0
    %2270 = vmatpush.msra.mxu0 0.0
    %2271 = vmatpush.msra.mxu0 0.0
    %2272 = vmatpush.msra.mxu0 0.0
    %2273 = vmatpush.msra.mxu0 0.0
    %2274 = vmatpush.msra.mxu0 0.0
    %2275 = vmatpush.msra.mxu0 0.0
    %2276 = vmatpush.msra.mxu0 0.0
    %2277 = vmatpush.msra.mxu0 0.0
    %2278 = vmatpush.msra.mxu0 0.0
    %2279 = vmatpush.msra.mxu0 %v190
    %2280 = vmatpush.msra.mxu0 %v189
    %2281 = vmatpush.msra.mxu0 %v188
    %2282 = vmatpush.msra.mxu0 %v187
    %2283 = vmatmul.f32.gmra.mxu0 %v2265
    %v2284 = vpop.f32.mrf.mxu0
    %v2285 = vadd.f32 %v207, %v2284
    %2286 = vdwg.mxu0
    %2287 = vmatpush.msra.mxu0 0.0
    %2288 = vmatpush.msra.mxu0 0.0
    %2289 = vmatpush.msra.mxu0 0.0
    %2290 = vmatpush.msra.mxu0 0.0
    %2291 = vmatpush.msra.mxu0 0.0
    %2292 = vmatpush.msra.mxu0 0.0
    %2293 = vmatpush.msra.mxu0 0.0
    %2294 = vmatpush.msra.mxu0 0.0
    %2295 = vmatpush.msra.mxu0 0.0
    %2296 = vmatpush.msra.mxu0 0.0
    %2297 = vmatpush.msra.mxu0 0.0
    %2298 = vmatpush.msra.mxu0 0.0
    %2299 = vmatpush.msra.mxu0 %v195
    %2300 = vmatpush.msra.mxu0 %v194
    %2301 = vmatpush.msra.mxu0 %v193
    %2302 = vmatpush.msra.mxu0 %v192
    %2303 = vmatmul.f32.gmra.mxu0 %v2265
    %v2304 = vpop.f32.mrf.mxu0
    %v2305 = vadd.f32 %v234, %v2304
    %2306 = vdwg.mxu0
    %2307 = vmatpush.msra.mxu0 0.0
    %2308 = vmatpush.msra.mxu0 0.0
    %2309 = vmatpush.msra.mxu0 0.0
    %2310 = vmatpush.msra.mxu0 0.0
    %2311 = vmatpush.msra.mxu0 0.0
    %2312 = vmatpush.msra.mxu0 0.0
    %2313 = vmatpush.msra.mxu0 0.0
    %2314 = vmatpush.msra.mxu0 0.0
    %2315 = vmatpush.msra.mxu0 0.0
    %2316 = vmatpush.msra.mxu0 0.0
    %2317 = vmatpush.msra.mxu0 0.0
    %2318 = vmatpush.msra.mxu0 0.0
    %2319 = vmatpush.msra.mxu0 %v200
    %2320 = vmatpush.msra.mxu0 %v199
    %2321 = vmatpush.msra.mxu0 %v198
    %2322 = vmatpush.msra.mxu0 %v197
    %2323 = vmatmul.f32.gmra.mxu0 %v2265
    %v2324 = vpop.f32.mrf.mxu0
    %v2325 = vadd.f32 %v257, %v2324
    %2326 = vdwg.mxu0
    %v2328 = vrot.slane %v2285, 1
    %v2329 = vrot.slane %v2285, 2
    %v2330 = vrot.slane %v2285, 3
    %v2331 = vrot.slane %v2285, 4
    %v2336 = vadd.f32 %v102, %v2328
    %v2337 = vadd.f32 %v105, %v2329
    %v2338 = vadd.f32 %v108, %v2330
    %v2339 = vadd.f32 %v111, %v2331
    %v2340 = vxor.u32 %v2336, 2147483648
    %v2341 = vxor.u32 %v2337, 2147483648
    %v2342 = vxor.u32 %v2338, 2147483648
    %v2343 = vxor.u32 %v2339, 2147483648
    %v2344 = vmul.f32 %v2340, 1.442695
    %v2345 = vpow.pop %v2344
    %v2346 = vmul.f32 %v2341, 1.442695
    %v2347 = vpow.pop %v2346
    %v2348 = vmul.f32 %v2342, 1.442695
    %v2349 = vpow.pop %v2348
    %v2350 = vmul.f32 %v2343, 1.442695
    %v2351 = vpow.pop %v2350
    %v2352 = vadd.f32 %v2345, 1.0
    %v2353 = vadd.f32 %v2347, 1.0
    %v2354 = vadd.f32 %v2349, 1.0
    %v2355 = vadd.f32 %v2351, 1.0
    %v2356 = vrcp.pop %v2352
    %v2357 = vmul.f32 %v2352, %v2356
    %v2358 = vsub.f32 1.0, %v2357
    %v2359 = vmul.f32 %v2356, %v2358
    %v2360 = vadd.f32 %v2356, %v2359
    %vm2361 = vweird.f32 %v2352
    %vm2362 = vweird.f32 %v2356
    %vm2363 = vmor %vm2361, %vm2362
    %v2364 = vsel %vm2363, %v2356, %v2360
    %v2365 = vand.u32 2147483647, %v2352
    %vm2366 = vcmp.eq.f32.partialorder %v2365, 8.507059e+37
    %v2367 = vand.u32 %v2352, 2147483648
    %v2368 = vor.u32 1.1754944e-38, %v2367
    %v2369 = vsel %vm2366, %v2368, %v2364
    %v2370 = vmul.f32 1.0, %v2369
    %v2371 = vrcp.pop %v2353
    %v2372 = vmul.f32 %v2353, %v2371
    %v2373 = vsub.f32 1.0, %v2372
    %v2374 = vmul.f32 %v2371, %v2373
    %v2375 = vadd.f32 %v2371, %v2374
    %vm2376 = vweird.f32 %v2353
    %vm2377 = vweird.f32 %v2371
    %vm2378 = vmor %vm2376, %vm2377
    %v2379 = vsel %vm2378, %v2371, %v2375
    %v2380 = vand.u32 2147483647, %v2353
    %vm2381 = vcmp.eq.f32.partialorder %v2380, 8.507059e+37
    %v2382 = vand.u32 %v2353, 2147483648
    %v2383 = vor.u32 1.1754944e-38, %v2382
    %v2384 = vsel %vm2381, %v2383, %v2379
    %v2385 = vmul.f32 1.0, %v2384
    %v2386 = vrcp.pop %v2354
    %v2387 = vmul.f32 %v2354, %v2386
    %v2388 = vsub.f32 1.0, %v2387
    %v2389 = vmul.f32 %v2386, %v2388
    %v2390 = vadd.f32 %v2386, %v2389
    %vm2391 = vweird.f32 %v2354
    %vm2392 = vweird.f32 %v2386
    %vm2393 = vmor %vm2391, %vm2392
    %v2394 = vsel %vm2393, %v2386, %v2390
    %v2395 = vand.u32 2147483647, %v2354
    %vm2396 = vcmp.eq.f32.partialorder %v2395, 8.507059e+37
    %v2397 = vand.u32 %v2354, 2147483648
    %v2398 = vor.u32 1.1754944e-38, %v2397
    %v2399 = vsel %vm2396, %v2398, %v2394
    %v2400 = vmul.f32 1.0, %v2399
    %v2401 = vrcp.pop %v2355
    %v2402 = vmul.f32 %v2355, %v2401
    %v2403 = vsub.f32 1.0, %v2402
    %v2404 = vmul.f32 %v2401, %v2403
    %v2405 = vadd.f32 %v2401, %v2404
    %vm2406 = vweird.f32 %v2355
    %vm2407 = vweird.f32 %v2401
    %vm2408 = vmor %vm2406, %vm2407
    %v2409 = vsel %vm2408, %v2401, %v2405
    %v2410 = vand.u32 2147483647, %v2355
    %vm2411 = vcmp.eq.f32.partialorder %v2410, 8.507059e+37
    %v2412 = vand.u32 %v2355, 2147483648
    %v2413 = vor.u32 1.1754944e-38, %v2412
    %v2414 = vsel %vm2411, %v2413, %v2409
    %v2415 = vmul.f32 1.0, %v2414
    %v2417 = vrot.slane %v2305, 1
    %v2418 = vrot.slane %v2305, 2
    %v2419 = vrot.slane %v2305, 3
    %v2420 = vrot.slane %v2305, 4
    %v2425 = vadd.f32 %v139, %v2417
    %v2426 = vadd.f32 %v142, %v2418
    %v2427 = vadd.f32 %v145, %v2419
    %v2428 = vadd.f32 %v148, %v2420
    %v2429 = vxor.u32 %v2425, 2147483648
    %v2430 = vxor.u32 %v2426, 2147483648
    %v2431 = vxor.u32 %v2427, 2147483648
    %v2432 = vxor.u32 %v2428, 2147483648
    %v2433 = vmul.f32 %v2429, 1.442695
    %v2434 = vpow.pop %v2433
    %v2435 = vmul.f32 %v2430, 1.442695
    %v2436 = vpow.pop %v2435
    %v2437 = vmul.f32 %v2431, 1.442695
    %v2438 = vpow.pop %v2437
    %v2439 = vmul.f32 %v2432, 1.442695
    %v2440 = vpow.pop %v2439
    %v2441 = vadd.f32 %v2434, 1.0
    %v2442 = vadd.f32 %v2436, 1.0
    %v2443 = vadd.f32 %v2438, 1.0
    %v2444 = vadd.f32 %v2440, 1.0
    %v2445 = vrcp.pop %v2441
    %v2446 = vmul.f32 %v2441, %v2445
    %v2447 = vsub.f32 1.0, %v2446
    %v2448 = vmul.f32 %v2445, %v2447
    %v2449 = vadd.f32 %v2445, %v2448
    %vm2450 = vweird.f32 %v2441
    %vm2451 = vweird.f32 %v2445
    %vm2452 = vmor %vm2450, %vm2451
    %v2453 = vsel %vm2452, %v2445, %v2449
    %v2454 = vand.u32 2147483647, %v2441
    %vm2455 = vcmp.eq.f32.partialorder %v2454, 8.507059e+37
    %v2456 = vand.u32 %v2441, 2147483648
    %v2457 = vor.u32 1.1754944e-38, %v2456
    %v2458 = vsel %vm2455, %v2457, %v2453
    %v2459 = vmul.f32 1.0, %v2458
    %v2460 = vrcp.pop %v2442
    %v2461 = vmul.f32 %v2442, %v2460
    %v2462 = vsub.f32 1.0, %v2461
    %v2463 = vmul.f32 %v2460, %v2462
    %v2464 = vadd.f32 %v2460, %v2463
    %vm2465 = vweird.f32 %v2442
    %vm2466 = vweird.f32 %v2460
    %vm2467 = vmor %vm2465, %vm2466
    %v2468 = vsel %vm2467, %v2460, %v2464
    %v2469 = vand.u32 2147483647, %v2442
    %vm2470 = vcmp.eq.f32.partialorder %v2469, 8.507059e+37
    %v2471 = vand.u32 %v2442, 2147483648
    %v2472 = vor.u32 1.1754944e-38, %v2471
    %v2473 = vsel %vm2470, %v2472, %v2468
    %v2474 = vmul.f32 1.0, %v2473
    %v2475 = vrcp.pop %v2443
    %v2476 = vmul.f32 %v2443, %v2475
    %v2477 = vsub.f32 1.0, %v2476
    %v2478 = vmul.f32 %v2475, %v2477
    %v2479 = vadd.f32 %v2475, %v2478
    %vm2480 = vweird.f32 %v2443
    %vm2481 = vweird.f32 %v2475
    %vm2482 = vmor %vm2480, %vm2481
    %v2483 = vsel %vm2482, %v2475, %v2479
    %v2484 = vand.u32 2147483647, %v2443
    %vm2485 = vcmp.eq.f32.partialorder %v2484, 8.507059e+37
    %v2486 = vand.u32 %v2443, 2147483648
    %v2487 = vor.u32 1.1754944e-38, %v2486
    %v2488 = vsel %vm2485, %v2487, %v2483
    %v2489 = vmul.f32 1.0, %v2488
    %v2490 = vrcp.pop %v2444
    %v2491 = vmul.f32 %v2444, %v2490
    %v2492 = vsub.f32 1.0, %v2491
    %v2493 = vmul.f32 %v2490, %v2492
    %v2494 = vadd.f32 %v2490, %v2493
    %vm2495 = vweird.f32 %v2444
    %vm2496 = vweird.f32 %v2490
    %vm2497 = vmor %vm2495, %vm2496
    %v2498 = vsel %vm2497, %v2490, %v2494
    %v2499 = vand.u32 2147483647, %v2444
    %vm2500 = vcmp.eq.f32.partialorder %v2499, 8.507059e+37
    %v2501 = vand.u32 %v2444, 2147483648
    %v2502 = vor.u32 1.1754944e-38, %v2501
    %v2503 = vsel %vm2500, %v2502, %v2498
    %v2504 = vmul.f32 1.0, %v2503
    %v2506 = vrot.slane %v2325, 1
    %v2507 = vrot.slane %v2325, 2
    %v2508 = vrot.slane %v2325, 3
    %v2509 = vrot.slane %v2325, 4
    %v2514 = vmul.f32 %v2370, %v2506
    %v2515 = vmul.f32 %v2385, %v2507
    %v2516 = vmul.f32 %v2400, %v2508
    %v2517 = vmul.f32 %v2415, %v2509
    %v2518 = vadd.f32 %v176, %v2514
    %v2519 = vadd.f32 %v179, %v2515
    %v2520 = vadd.f32 %v182, %v2516
    %v2521 = vadd.f32 %v185, %v2517
    %v2522 = vtanh.pop %v2518
    %v2523 = vtanh.pop %v2519
    %v2524 = vtanh.pop %v2520
    %v2525 = vtanh.pop %v2521
    %v2526 = vsub.f32 1.0, %v2459
    %v2527 = vsub.f32 1.0, %v2474
    %v2528 = vsub.f32 1.0, %v2489
    %v2529 = vsub.f32 1.0, %v2504
    %v2530 = vmul.f32 %v2526, %v2522
    %v2531 = vmul.f32 %v2527, %v2523
    %v2532 = vmul.f32 %v2528, %v2524
    %v2533 = vmul.f32 %v2529, %v2525
    %v2534 = vrot.slane %v2250, 7
    %v2535 = vrot.slane %v2251, 7
    %v2536 = vrot.slane %v2252, 7
    %v2537 = vrot.slane %v2253, 7
    %v2542 = vmul.f32 %v2459, %v2534
    %v2543 = vmul.f32 %v2474, %v2535
    %v2544 = vmul.f32 %v2489, %v2536
    %v2545 = vmul.f32 %v2504, %v2537
    %v2546 = vadd.f32 %v2530, %v2542
    %v2547 = vadd.f32 %v2531, %v2543
    %v2548 = vadd.f32 %v2532, %v2544
    %v2549 = vadd.f32 %v2533, %v2545
    %v2550 = vld [vmem:[%s5] sm:$0xff]
    %v2551 = vld [vmem:[%s5 + $0x8] sm:$0xff]
    %v2552 = vld [vmem:[%s5 + $0x10] sm:$0xff]
    %v2553 = vld [vmem:[%s5 + $0x18] sm:$0xff]
    %v2554 = vld [vmem:[%s6] sm:$0x1]
    %v2556 = vperm.slane %v2554, 0
    %v2562 = vrot.slane %v2546, 7
    %v2563 = vrot.slane %v2547, 6
    %v2564 = vsel %vm496, %v2563, %v2562
    %v2565 = vrot.slane %v2548, 5
    %v2566 = vsel %vm499, %v2565, %v2564
    %v2567 = vrot.slane %v2549, 4
    %v2568 = vsel %vm502, %v2567, %v2566
    %v2569 = vsel %vm209, %v2568, 0
    %2571 = vmatpush.msra.mxu0 0.0
    %2572 = vmatpush.msra.mxu0 0.0
    %2573 = vmatpush.msra.mxu0 0.0
    %2574 = vmatpush.msra.mxu0 0.0
    %2575 = vmatpush.msra.mxu0 0.0
    %2576 = vmatpush.msra.mxu0 0.0
    %2577 = vmatpush.msra.mxu0 0.0
    %2578 = vmatpush.msra.mxu0 0.0
    %2579 = vmatpush.msra.mxu0 0.0
    %2580 = vmatpush.msra.mxu0 0.0
    %2581 = vmatpush.msra.mxu0 0.0
    %2582 = vmatpush.msra.mxu0 0.0
    %2583 = vmatpush.msra.mxu0 %v2553
    %2584 = vmatpush.msra.mxu0 %v2552
    %2585 = vmatpush.msra.mxu0 %v2551
    %2586 = vmatpush.msra.mxu0 %v2550
    %2587 = vmatmul.f32.gmra.mxu0 %v2569
    %v2588 = vpop.f32.mrf.mxu0
    %v2589 = vadd.f32 %v2556, %v2588
    %2590 = vdwg.mxu0
    %vm2591 = vcmask 60416
    %2592 = vst.msk [vmem:[%s7] sm:$0xf] %vm2591, %v2589
    %v2593 = vsel %vm2591, %v2589, -inf
    %2594 = vmax.xlane.f32.xlu0 %v2593
    %v2595 = vpop.xlane.xlu0 %2594
    %v2596 = vsub.f32 %v2589, %v2595
    %v2597 = vmul.f32 %v2596, 1.442695
    %v2598 = vpow.pop %v2597
    %v2599 = vsel %vm2591, %v2598, 0.0
    %2600 = vadd.xlane.f32.xlu0 %v2599
    %v2601 = vpop.xlane.xlu0 %2600
    %v2602 = vrcp.pop %v2601
    %v2603 = vmul.f32 %v2598, %v2602
    %2604 = vst.msk [vmem:[#allocation7] sm:$0xf] %vm2591, %v2603
    %2606 = vrot.lane.b32.xlu0 %v2589, 120
    %v2607 = vpop.permute.xlu0 %2606
    %s2609 = scalar_lea.vmem %s7, 4
    %2610 = vst.msk [vmem:[%s2609] sm:$0xf] %vm2591, %v2607
    %vm2611 = vcmask 126016
    %v2612 = vsel %vm2611, %v2589, -inf
    %2613 = vmax.xlane.f32.xlu0 %v2612
    %v2614 = vpop.xlane.xlu0 %2613
    %v2615 = vsub.f32 %v2589, %v2614
    %v2616 = vmul.f32 %v2615, 1.442695
    %v2617 = vpow.pop %v2616
    %2619 = vrot.lane.b32.xlu0 %v2617, 120
    %v2620 = vpop.permute.xlu0 %2619
    %v2622 = vsel %vm2591, %v2620, 0.0
    %2623 = vadd.xlane.f32.xlu0 %v2622
    %v2624 = vpop.xlane.xlu0 %2623
    %v2625 = vrcp.pop %v2624
    %v2626 = vmul.f32 %v2617, %v2625
    %2628 = vrot.lane.b32.xlu0 %v2626, 120
    %v2629 = vpop.permute.xlu0 %2628
    %s2631 = scalar_lea.vmem [#allocation7], 4
    %2632 = vst.msk [vmem:[%s2631] sm:$0xf] %vm2591, %v2629
    %2633 = vrot.lane.b32.xlu0 %v2589, 112
    %v2634 = vpop.permute.xlu0 %2633
    %s2636 = scalar_lea.vmem %s7, 8
    %2637 = vst.msk [vmem:[%s2636] sm:$0xf] %vm2591, %v2634
    %vm2638 = vcmask 191616
    %v2639 = vsel %vm2638, %v2589, -inf
    %2640 = vmax.xlane.f32.xlu0 %v2639
    %v2641 = vpop.xlane.xlu0 %2640
    %v2642 = vsub.f32 %v2589, %v2641
    %v2643 = vmul.f32 %v2642, 1.442695
    %v2644 = vpow.pop %v2643
    %2646 = vrot.lane.b32.xlu0 %v2644, 112
    %v2647 = vpop.permute.xlu0 %2646
    %v2649 = vsel %vm2591, %v2647, 0.0
    %2650 = vadd.xlane.f32.xlu0 %v2649
    %v2651 = vpop.xlane.xlu0 %2650
    %v2652 = vrcp.pop %v2651
    %v2653 = vmul.f32 %v2644, %v2652
    %2655 = vrot.lane.b32.xlu0 %v2653, 112
    %v2656 = vpop.permute.xlu0 %2655
    %s2658 = scalar_lea.vmem [#allocation7], 8
    %2659 = vst.msk [vmem:[%s2658] sm:$0xf] %vm2591, %v2656
    // Predicated region
    $region38: #{single_model_forward.1} parent=1 // pred_check
      _
    $region39: #{single_model_forward.1} parent=1 // pred_check_branch
      %2661 = sbr.rel (0) target = $region41
    $region40: #{single_model_forward.1} parent=1 // pred_region
      _
    $region41: #{single_model_forward.1} parent=1 // pred_fallthru
      _
    // Predicated region
    $region42: #{single_model_forward.1} parent=1 // pred_check
      _
    $region43: #{single_model_forward.1} parent=1 // pred_check_branch
      %2663 = sbr.rel (0) target = $region45
    $region44: #{single_model_forward.1} parent=1 // pred_region
      %2665 = vsyncadd [#allocation4], 0
      %s2666 = sshll.u32 [#allocation7], 4
      %s2667 = int_to_ptr.vmem [resolvable:$true] %s2666
      %s2668 = sshll.u32 %s8, 4
      %s2669 = int_to_ptr.hbm [resolvable:$true] %s2668
      %2674 = dma.vmem_to_hbm [thread:$0]  %s2667, 192, %s2669, [#allocation4], 64, 64, 4
    $region45: #{single_model_forward.1} parent=1 // pred_fallthru
      _
    // Predicated region
    $region46: #{single_model_forward.1} parent=1 // pred_check
      _
    $region47: #{single_model_forward.1} parent=1 // pred_check_branch
      %2676 = sbr.rel (0) target = $region49
    $region48: #{single_model_forward.1} parent=1 // pred_region
      _
    $region49: #{single_model_forward.1} parent=1 // pred_fallthru
      _
    // Predicated region
    $region50: #{single_model_forward.1} parent=1 // pred_check
      _
    $region51: #{single_model_forward.1} parent=1 // pred_check_branch
      %2678 = sbr.rel (0) target = $region53
    $region52: #{single_model_forward.1} parent=1 // pred_region
      %2680 = dma.done [#allocation4], 192
    $region53: #{single_model_forward.1} parent=1 // pred_fallthru
      _
    %2681 = vsyncpa [#allocation3], 1
    %2682 = vsyncpa [#allocation6], 1
    %2683 = vsyncpa [#allocation4], 1

</llo_original>
